<compile_context>
chip_gen: v7x
topology: tpu7x:2x2x1
jax: 0.10.0
libtpu: 0.0.40
codegen_flags: <defaults>
</compile_context>

<pallas_src>
import math
from functools import partial

import jax
import jax.numpy as jnp
from jax import lax
from jax.experimental import pallas as pl
from jax.experimental.pallas import tpu as pltpu


# ----------------------------- tiling helper -----------------------------

def _pick_tile(dim, target):
    """Largest power-of-two-ish tile <= target that divides dim, else dim."""
    t = target
    while t > 8:
        if dim % t == 0:
            return t
        t //= 2
    return dim


# ------------------- fused MHA + residual + LayerNorm kernel -------------------

def _mha_ln_kernel(xq_ref, xkv_ref, wq_ref, bq_ref, wkv_ref, bkv_ref,
                   wo_ref, bo_ref, g_ref, bt_ref, o_ref, *, num_heads):
    xq = xq_ref[0]                                   # (Sq, E)
    xkv = xkv_ref[0]                                 # (Sk, E)
    E = xq.shape[-1]
    Dh = E // num_heads

    # Fused projections (scale already folded into wq / bq).
    q = jnp.dot(xq, wq_ref[...], preferred_element_type=jnp.float32) + bq_ref[...]
    kv = jnp.dot(xkv, wkv_ref[...], preferred_element_type=jnp.float32) + bkv_ref[...]

    # Per-head attention; output projection accumulated head-by-head so the
    # concat over heads never materializes:  concat_h(o_h) @ Wo == sum_h o_h @ Wo[h].
    acc = jnp.zeros_like(q)                          # (Sq, E)
    for h in range(num_heads):
        lo = h * Dh
        qh = q[:, lo:lo + Dh]                        # (Sq, Dh)
        kh = kv[:, lo:lo + Dh]                       # (Sk, Dh)
        vh = kv[:, E + lo:E + lo + Dh]               # (Sk, Dh)
        s = lax.dot_general(qh, kh, (((1,), (1,)), ((), ())),
                            preferred_element_type=jnp.float32)   # (Sq, Sk)
        s = s - jnp.max(s, axis=-1, keepdims=True)
        p = jnp.exp(s)
        p = p * pl.reciprocal(jnp.sum(p, axis=-1, keepdims=True), approx=True)
        oh = jnp.dot(p, vh, preferred_element_type=jnp.float32)   # (Sq, Dh)
        acc = acc + jnp.dot(oh, wo_ref[lo:lo + Dh, :],
                            preferred_element_type=jnp.float32)   # (Sq, E)

    # Output bias + residual + LayerNorm, all in-register.
    y = acc + bo_ref[...] + xq
    mean = jnp.mean(y, axis=-1, keepdims=True)
    var = jnp.mean((y - mean) ** 2, axis=-1, keepdims=True)
    o_ref[0] = (y - mean) * lax.rsqrt(var + 1e-5) * g_ref[...] + bt_ref[...]


def fused_mha(xq, xkv, ap, gamma, beta, num_heads):
    """LayerNorm(MHA(xq, xkv) + xq).  xq:(B,Sq,E)  xkv:(B,Sk,E)."""
    B, Sq, E = xq.shape
    Sk = xkv.shape[1]
    kern = partial(_mha_ln_kernel, num_heads=num_heads)
    return pl.pallas_call(
        kern,
        out_shape=jax.ShapeDtypeStruct((B, Sq, E), jnp.float32),
        grid=(B,),
        in_specs=[pl.BlockSpec((1, Sq, E), lambda b: (b, 0, 0)),
                  pl.BlockSpec((1, Sk, E), lambda b: (b, 0, 0)),
                  pl.BlockSpec((E, E), lambda b: (0, 0)),
                  pl.BlockSpec((1, E), lambda b: (0, 0)),
                  pl.BlockSpec((E, 2 * E), lambda b: (0, 0)),
                  pl.BlockSpec((1, 2 * E), lambda b: (0, 0)),
                  pl.BlockSpec((E, E), lambda b: (0, 0)),
                  pl.BlockSpec((1, E), lambda b: (0, 0)),
                  pl.BlockSpec((1, E), lambda b: (0, 0)),
                  pl.BlockSpec((1, E), lambda b: (0, 0))],
        out_specs=pl.BlockSpec((1, Sq, E), lambda b: (b, 0, 0)),
        compiler_params=pltpu.CompilerParams(dimension_semantics=("parallel",)),
    )(xq, xkv, ap["wq"], ap["bq"], ap["wkv"], ap["bkv"],
      ap["wo"], ap["bo"], gamma, beta)


# ------------------- fused FFN + residual + LayerNorm kernel -------------------

def _ffn_ln_kernel(x_ref, w1_ref, b1_ref, w2_ref, b2_ref, g_ref, bt_ref, o_ref):
    x = x_ref[...]                                   # (tm, E)
    h = jnp.dot(x, w1_ref[...], preferred_element_type=jnp.float32) + b1_ref[...]
    h = jnp.maximum(h, 0.0)                          # (tm, F) stays in VMEM
    y = jnp.dot(h, w2_ref[...], preferred_element_type=jnp.float32) + b2_ref[...] + x
    mean = jnp.mean(y, axis=-1, keepdims=True)
    var = jnp.mean((y - mean) ** 2, axis=-1, keepdims=True)
    o_ref[...] = (y - mean) * lax.rsqrt(var + 1e-5) * g_ref[...] + bt_ref[...]


def fused_ffn_ln(x2d, w1, b1, w2, b2, gamma, beta, *, tm_target=256):
    M, E = x2d.shape
    F = w1.shape[1]
    tm = _pick_tile(M, tm_target)
    return pl.pallas_call(
        _ffn_ln_kernel,
        out_shape=jax.ShapeDtypeStruct((M, E), jnp.float32),
        grid=(M // tm,),
        in_specs=[pl.BlockSpec((tm, E), lambda i: (i, 0)),
                  pl.BlockSpec((E, F), lambda i: (0, 0)),
                  pl.BlockSpec((1, F), lambda i: (0, 0)),
                  pl.BlockSpec((F, E), lambda i: (0, 0)),
                  pl.BlockSpec((1, E), lambda i: (0, 0)),
                  pl.BlockSpec((1, E), lambda i: (0, 0)),
                  pl.BlockSpec((1, E), lambda i: (0, 0))],
        out_specs=pl.BlockSpec((tm, E), lambda i: (i, 0)),
        compiler_params=pltpu.CompilerParams(dimension_semantics=("parallel",)),
    )(x2d, w1, b1, w2, b2, gamma, beta)


# ------------------------ tiled linear (vocab projection) ------------------------

def _matmul_bias_kernel(x_ref, w_ref, b_ref, o_ref, acc_ref):
    @pl.when(pl.program_id(2) == 0)
    def _():
        acc_ref[...] = jnp.zeros_like(acc_ref)
    acc_ref[...] += jnp.dot(x_ref[...], w_ref[...],
                            preferred_element_type=jnp.float32)
    @pl.when(pl.program_id(2) == pl.num_programs(2) - 1)
    def _():
        o_ref[...] = acc_ref[...] + b_ref[...]


def linear_tiled(x2d, w, b, *, tm_target=256, tn_target=256, tk_target=512):
    """y = x2d @ w + b with a 3-D tiled grid and f32 accumulator scratch."""
    M, K = x2d.shape
    N = w.shape[1]
    tm = _pick_tile(M, tm_target)
    tn = _pick_tile(N, tn_target)
    tk = _pick_tile(K, tk_target)
    return pl.pallas_call(
        _matmul_bias_kernel,
        out_shape=jax.ShapeDtypeStruct((M, N), jnp.float32),
        grid=(M // tm, N // tn, K // tk),
        in_specs=[pl.BlockSpec((tm, tk), lambda i, j, k: (i, k)),
                  pl.BlockSpec((tk, tn), lambda i, j, k: (k, j)),
                  pl.BlockSpec((1, tn), lambda i, j, k: (0, j))],
        out_specs=pl.BlockSpec((tm, tn), lambda i, j, k: (i, j)),
        scratch_shapes=[pltpu.VMEM((tm, tn), jnp.float32)],
        compiler_params=pltpu.CompilerParams(
            dimension_semantics=("parallel", "parallel", "arbitrary")),
    )(x2d, w, b)


# ----------------------------- model pieces -----------------------------

def encoder_layer(x, p, num_heads):
    B, S, E = x.shape
    x1 = fused_mha(x, x, p["attn"], p["ln1_g"], p["ln1_b"], num_heads)
    out = fused_ffn_ln(x1.reshape(-1, E), p["w1"], p["b1"], p["w2"], p["b2"],
                       p["ln2_g"], p["ln2_b"])
    return out.reshape(B, S, E)


def decoder_layer(y, enc_out, p, num_heads):
    # TODO(synk): no causal mask -- matches nn.Transformer default (no tgt_mask).
    B, S, E = y.shape
    y1 = fused_mha(y, y, p["self_attn"], p["ln1_g"], p["ln1_b"], num_heads)
    y2 = fused_mha(y1, enc_out, p["cross_attn"], p["ln2_g"], p["ln2_b"], num_heads)
    out = fused_ffn_ln(y2.reshape(-1, E), p["w1"], p["b1"], p["w2"], p["b2"],
                       p["ln3_g"], p["ln3_b"])
    return out.reshape(B, S, E)


def positional_encoding(seq_len, embed_size):
    pos = jnp.arange(seq_len, dtype=jnp.float32)[:, None]
    idx = jnp.arange(0, embed_size, 2, dtype=jnp.float32)
    div = jnp.exp(-math.log(10000.0) * idx / embed_size)
    pe = jnp.zeros((seq_len, embed_size), jnp.float32)
    pe = pe.at[:, 0::2].set(jnp.sin(pos * div))
    pe = pe.at[:, 1::2].set(jnp.cos(pos * div))
    return pe


def transformer_forward(params, x_tokens, *, num_heads, vocab_size):
    emb = params["embedding"]                        # (V, E)
    B, S = x_tokens.shape
    E = emb.shape[1]
    # TODO(synk): embedding gather + PE construction kept as XLA glue.
    x = jnp.take(emb, x_tokens, axis=0)              # (B, S, E)
    x = x + positional_encoding(S, E)[None]
    y = x                                            # forward(x, y=None) path

    for lp in params["enc_layers"]:
        x = encoder_layer(x, lp, num_heads)
    for lp in params["dec_layers"]:
        y = decoder_layer(y, x, lp, num_heads)

    # Vocab dim padded to a multiple of 128 for lane-dense stores; slice back.
    logits = linear_tiled(y.reshape(B * S, E), params["fc_w"], params["fc_b"])
    return logits[:, :vocab_size].reshape(B, S, vocab_size)


# ----------------------------- parameter init -----------------------------

def init_params(key, embed_size, num_heads, ff_dim, num_layers, vocab_size):
    keys = iter(jax.random.split(key, 1024))

    def dense(nin, nout, scale=None):
        scale = scale if scale is not None else 1.0 / math.sqrt(nin)
        w = scale * jax.random.normal(next(keys), (nin, nout), jnp.float32)
        b = jnp.zeros((1, nout), jnp.float32)
        return w, b

    def attn_params():
        head_dim = embed_size // num_heads
        sm_scale = 1.0 / math.sqrt(head_dim)
        wq, bq = dense(embed_size, embed_size)
        wk, bk = dense(embed_size, embed_size)
        wv, bv = dense(embed_size, embed_size)
        wo, bo = dense(embed_size, embed_size)
        # Fold the attention scale into the Q projection; pre-concat K/V.
        return dict(wq=wq * sm_scale, bq=bq * sm_scale,
                    wkv=jnp.concatenate([wk, wv], axis=1),
                    bkv=jnp.concatenate([bk, bv], axis=1),
                    wo=wo, bo=bo)

    def ln():
        return (jnp.ones((1, embed_size), jnp.float32),
                jnp.zeros((1, embed_size), jnp.float32))

    def enc_layer():
        g1, b1_ = ln(); g2, b2_ = ln()
        w1, b1 = dense(embed_size, ff_dim)
        w2, b2 = dense(ff_dim, embed_size)
        return dict(attn=attn_params(), ln1_g=g1, ln1_b=b1_, ln2_g=g2, ln2_b=b2_,
                    w1=w1, b1=b1, w2=w2, b2=b2)

    def dec_layer():
        g1, b1_ = ln(); g2, b2_ = ln(); g3, b3_ = ln()
        w1, b1 = dense(embed_size, ff_dim)
        w2, b2 = dense(ff_dim, embed_size)
        return dict(self_attn=attn_params(), cross_attn=attn_params(),
                    ln1_g=g1, ln1_b=b1_, ln2_g=g2, ln2_b=b2_, ln3_g=g3, ln3_b=b3_,
                    w1=w1, b1=b1, w2=w2, b2=b2)

    fc_w, fc_b = dense(embed_size, vocab_size)
    n_pad = ((vocab_size + 127) // 128) * 128
    fc_w = jnp.pad(fc_w, ((0, 0), (0, n_pad - vocab_size)))
    fc_b = jnp.pad(fc_b, ((0, 0), (0, n_pad - vocab_size)))

    return dict(
        embedding=jax.random.normal(next(keys), (vocab_size, embed_size), jnp.float32),
        enc_layers=[enc_layer() for _ in range(num_layers)],
        dec_layers=[dec_layer() for _ in range(num_layers)],
        fc_w=fc_w, fc_b=fc_b,
    )


# ----------------------------- main -----------------------------

if __name__ == "__main__":
    embed_size, num_heads, ff_dim, num_layers, vocab_size = 32, 4, 64, 2, 50
    batch, seq = 2, 8

    key = jax.random.PRNGKey(0)
    k_param, k_tok = jax.random.split(key)
    params = init_params(k_param, embed_size, num_heads, ff_dim, num_layers, vocab_size)

    x_tokens = jax.random.randint(k_tok, (batch, seq), 0, vocab_size, dtype=jnp.int32)

    fwd = jax.jit(partial(transformer_forward,
                          num_heads=num_heads, vocab_size=vocab_size))
    out = fwd(params, x_tokens)
    out = jax.block_until_ready(out)
    assert out.shape == (batch, seq, vocab_size), out.shape
    assert out.dtype == jnp.float32
    print("KERNEL_OK")
</pallas_src>

<mosaic_0001>
module attributes {stable_mosaic.version = 11 : i64} {
  func.func @_ffn_ln_kernel(%arg0: i32, %arg1: memref<16x32xf32, #tpu.memory_space<vmem>>, %arg2: memref<32x64xf32, #tpu.memory_space<vmem>>, %arg3: memref<1x64xf32, #tpu.memory_space<vmem>>, %arg4: memref<64x32xf32, #tpu.memory_space<vmem>>, %arg5: memref<1x32xf32, #tpu.memory_space<vmem>>, %arg6: memref<1x32xf32, #tpu.memory_space<vmem>>, %arg7: memref<1x32xf32, #tpu.memory_space<vmem>>, %arg8: memref<16x32xf32, #tpu.memory_space<vmem>>) attributes {dimension_semantics = [#tpu.dimension_semantics<parallel>], iteration_bounds = array<i64: 1>, scalar_prefetch = 0 : i64, scratch_operands = 0 : i64, tpu.core_type = #tpu.core_type<tc>, window_params = [{transform_indices = @transform_0, window_bounds = array<i64: 16, 32>}, {pipeline_mode = #tpu.pipeline_mode<synchronous>, transform_indices = @transform_1, window_bounds = array<i64: 32, 64>}, {pipeline_mode = #tpu.pipeline_mode<synchronous>, transform_indices = @transform_2, window_bounds = array<i64: 1, 64>}, {pipeline_mode = #tpu.pipeline_mode<synchronous>, transform_indices = @transform_3, window_bounds = array<i64: 64, 32>}, {pipeline_mode = #tpu.pipeline_mode<synchronous>, transform_indices = @transform_4, window_bounds = array<i64: 1, 32>}, {pipeline_mode = #tpu.pipeline_mode<synchronous>, transform_indices = @transform_5, window_bounds = array<i64: 1, 32>}, {pipeline_mode = #tpu.pipeline_mode<synchronous>, transform_indices = @transform_6, window_bounds = array<i64: 1, 32>}, {transform_indices = @transform_7, window_bounds = array<i64: 16, 32>}]} {
    %c0 = arith.constant 0 : index
    %c0_0 = arith.constant 0 : index
    %0 = vector.load %arg1[%c0, %c0_0] : memref<16x32xf32, #tpu.memory_space<vmem>>, vector<16x32xf32>
    %c0_1 = arith.constant 0 : index
    %c0_2 = arith.constant 0 : index
    %1 = vector.load %arg2[%c0_1, %c0_2] : memref<32x64xf32, #tpu.memory_space<vmem>>, vector<32x64xf32>
    %cst = arith.constant dense<0.000000e+00> : vector<16x64xf32>
    %2 = tpu.matmul %0, %1, %cst {dimension_numbers = #tpu.dot_dimension_numbers<[1], [0], [0], [1], [0, 0, 1, 1], [], []>} : vector<16x32xf32>, vector<32x64xf32>, vector<16x64xf32> -> vector<16x64xf32>
    %c0_3 = arith.constant 0 : index
    %c0_4 = arith.constant 0 : index
    %3 = vector.load %arg3[%c0_3, %c0_4] : memref<1x64xf32, #tpu.memory_space<vmem>>, vector<1x64xf32>
    %4 = vector.broadcast %3 : vector<1x64xf32> to vector<16x64xf32>
    %5 = arith.addf %2, %4 : vector<16x64xf32>
    %cst_5 = arith.constant 0.000000e+00 : f32
    %6 = vector.broadcast %cst_5 : f32 to vector<16x64xf32>
    %7 = arith.maximumf %5, %6 : vector<16x64xf32>
    %c0_6 = arith.constant 0 : index
    %c0_7 = arith.constant 0 : index
    %8 = vector.load %arg4[%c0_6, %c0_7] : memref<64x32xf32, #tpu.memory_space<vmem>>, vector<64x32xf32>
    %cst_8 = arith.constant dense<0.000000e+00> : vector<16x32xf32>
    %9 = tpu.matmul %7, %8, %cst_8 {dimension_numbers = #tpu.dot_dimension_numbers<[1], [0], [0], [1], [0, 0, 1, 1], [], []>} : vector<16x64xf32>, vector<64x32xf32>, vector<16x32xf32> -> vector<16x32xf32>
    %c0_9 = arith.constant 0 : index
    %c0_10 = arith.constant 0 : index
    %10 = vector.load %arg5[%c0_9, %c0_10] : memref<1x32xf32, #tpu.memory_space<vmem>>, vector<1x32xf32>
    %11 = vector.broadcast %10 : vector<1x32xf32> to vector<16x32xf32>
    %12 = arith.addf %9, %11 : vector<16x32xf32>
    %13 = arith.addf %12, %0 : vector<16x32xf32>
    %cst_11 = arith.constant dense<0.000000e+00> : vector<16xf32>
    %14 = vector.multi_reduction <add>, %13, %cst_11 [1] : vector<16x32xf32> to vector<16xf32>
    %15 = vector.shape_cast %14 : vector<16xf32> to vector<16x1xf32>
    %cst_12 = arith.constant 3.200000e+01 : f32
    %16 = vector.broadcast %cst_12 : f32 to vector<16x1xf32>
    %17 = arith.divf %15, %16 : vector<16x1xf32>
    %18 = vector.broadcast %17 : vector<16x1xf32> to vector<16x32xf32>
    %19 = arith.subf %13, %18 : vector<16x32xf32>
    %20 = arith.mulf %19, %19 : vector<16x32xf32>
    %cst_13 = arith.constant dense<0.000000e+00> : vector<16xf32>
    %21 = vector.multi_reduction <add>, %20, %cst_13 [1] : vector<16x32xf32> to vector<16xf32>
    %22 = vector.shape_cast %21 : vector<16xf32> to vector<16x1xf32>
    %cst_14 = arith.constant 3.200000e+01 : f32
    %23 = vector.broadcast %cst_14 : f32 to vector<16x1xf32>
    %24 = arith.divf %22, %23 : vector<16x1xf32>
    %25 = vector.broadcast %17 : vector<16x1xf32> to vector<16x32xf32>
    %26 = arith.subf %13, %25 : vector<16x32xf32>
    %cst_15 = arith.constant 9.99999974E-6 : f32
    %27 = vector.broadcast %cst_15 : f32 to vector<16x1xf32>
    %28 = arith.addf %24, %27 : vector<16x1xf32>
    %29 = math.rsqrt %28 : vector<16x1xf32>
    %30 = vector.broadcast %29 : vector<16x1xf32> to vector<16x32xf32>
    %31 = arith.mulf %26, %30 : vector<16x32xf32>
    %c0_16 = arith.constant 0 : index
    %c0_17 = arith.constant 0 : index
    %32 = vector.load %arg6[%c0_16, %c0_17] : memref<1x32xf32, #tpu.memory_space<vmem>>, vector<1x32xf32>
    %33 = vector.broadcast %32 : vector<1x32xf32> to vector<16x32xf32>
    %34 = arith.mulf %31, %33 : vector<16x32xf32>
    %c0_18 = arith.constant 0 : index
    %c0_19 = arith.constant 0 : index
    %35 = vector.load %arg7[%c0_18, %c0_19] : memref<1x32xf32, #tpu.memory_space<vmem>>, vector<1x32xf32>
    %36 = vector.broadcast %35 : vector<1x32xf32> to vector<16x32xf32>
    %37 = arith.addf %34, %36 : vector<16x32xf32>
    %c0_20 = arith.constant 0 : index
    %c0_21 = arith.constant 0 : index
    %38 = vector.load %arg8[%c0_20, %c0_21] : memref<16x32xf32, #tpu.memory_space<vmem>>, vector<16x32xf32>
    tpu.vector_store %arg8[%c0_20, %c0_21], %37 {strides = array<i32>} : memref<16x32xf32, #tpu.memory_space<vmem>>, vector<16x32xf32>,
    return
  }
  func.func @transform_0(%arg0: i32) -> (i32, i32) {
    %c0_i32 = arith.constant 0 : i32
    %c0_i32_0 = arith.constant 0 : i32
    return %arg0, %c0_i32 : i32, i32
  }
  func.func @transform_1(%arg0: i32) -> (i32, i32) {
    %c0_i32 = arith.constant 0 : i32
    %c0_i32_0 = arith.constant 0 : i32
    %c0_i32_1 = arith.constant 0 : i32
    return %c0_i32, %c0_i32_0 : i32, i32
  }
  func.func @transform_2(%arg0: i32) -> (i32, i32) {
    %c0_i32 = arith.constant 0 : i32
    %c0_i32_0 = arith.constant 0 : i32
    %c0_i32_1 = arith.constant 0 : i32
    return %c0_i32, %c0_i32_0 : i32, i32
  }
  func.func @transform_3(%arg0: i32) -> (i32, i32) {
    %c0_i32 = arith.constant 0 : i32
    %c0_i32_0 = arith.constant 0 : i32
    %c0_i32_1 = arith.constant 0 : i32
    return %c0_i32, %c0_i32_0 : i32, i32
  }
  func.func @transform_4(%arg0: i32) -> (i32, i32) {
    %c0_i32 = arith.constant 0 : i32
    %c0_i32_0 = arith.constant 0 : i32
    %c0_i32_1 = arith.constant 0 : i32
    return %c0_i32, %c0_i32_0 : i32, i32
  }
  func.func @transform_5(%arg0: i32) -> (i32, i32) {
    %c0_i32 = arith.constant 0 : i32
    %c0_i32_0 = arith.constant 0 : i32
    %c0_i32_1 = arith.constant 0 : i32
    return %c0_i32, %c0_i32_0 : i32, i32
  }
  func.func @transform_6(%arg0: i32) -> (i32, i32) {
    %c0_i32 = arith.constant 0 : i32
    %c0_i32_0 = arith.constant 0 : i32
    %c0_i32_1 = arith.constant 0 : i32
    return %c0_i32, %c0_i32_0 : i32, i32
  }
  func.func @transform_7(%arg0: i32) -> (i32, i32) {
    %c0_i32 = arith.constant 0 : i32
    %c0_i32_0 = arith.constant 0 : i32
    return %arg0, %c0_i32 : i32, i32
  }
}

module attributes {stable_mosaic.version = 11 : i64} {
  func.func @_mha_ln_kernel(%arg0: i32, %arg1: memref<1x8x32xf32, #tpu.memory_space<vmem>>, %arg2: memref<1x8x32xf32, #tpu.memory_space<vmem>>, %arg3: memref<32x32xf32, #tpu.memory_space<vmem>>, %arg4: memref<1x32xf32, #tpu.memory_space<vmem>>, %arg5: memref<32x64xf32, #tpu.memory_space<vmem>>, %arg6: memref<1x64xf32, #tpu.memory_space<vmem>>, %arg7: memref<32x32xf32, #tpu.memory_space<vmem>>, %arg8: memref<1x32xf32, #tpu.memory_space<vmem>>, %arg9: memref<1x32xf32, #tpu.memory_space<vmem>>, %arg10: memref<1x32xf32, #tpu.memory_space<vmem>>, %arg11: memref<1x8x32xf32, #tpu.memory_space<vmem>>) attributes {dimension_semantics = [#tpu.dimension_semantics<parallel>], iteration_bounds = array<i64: 2>, scalar_prefetch = 0 : i64, scratch_operands = 0 : i64, tpu.core_type = #tpu.core_type<tc>, window_params = [{transform_indices = @transform_0, window_bounds = array<i64: 1, 8, 32>}, {transform_indices = @transform_1, window_bounds = array<i64: 1, 8, 32>}, {pipeline_mode = #tpu.pipeline_mode<synchronous>, transform_indices = @transform_2, window_bounds = array<i64: 32, 32>}, {pipeline_mode = #tpu.pipeline_mode<synchronous>, transform_indices = @transform_3, window_bounds = array<i64: 1, 32>}, {pipeline_mode = #tpu.pipeline_mode<synchronous>, transform_indices = @transform_4, window_bounds = array<i64: 32, 64>}, {pipeline_mode = #tpu.pipeline_mode<synchronous>, transform_indices = @transform_5, window_bounds = array<i64: 1, 64>}, {pipeline_mode = #tpu.pipeline_mode<synchronous>, transform_indices = @transform_6, window_bounds = array<i64: 32, 32>}, {pipeline_mode = #tpu.pipeline_mode<synchronous>, transform_indices = @transform_7, window_bounds = array<i64: 1, 32>}, {pipeline_mode = #tpu.pipeline_mode<synchronous>, transform_indices = @transform_8, window_bounds = array<i64: 1, 32>}, {pipeline_mode = #tpu.pipeline_mode<synchronous>, transform_indices = @transform_9, window_bounds = array<i64: 1, 32>}, {transform_indices = @transform_10, window_bounds = array<i64: 1, 8, 32>}]} {
    %c0 = arith.constant 0 : index
    %c0_0 = arith.constant 0 : index
    %c0_1 = arith.constant 0 : index
    %0 = vector.load %arg1[%c0, %c0_0, %c0_1] : memref<1x8x32xf32, #tpu.memory_space<vmem>>, vector<1x8x32xf32>
    %1 = vector.shape_cast %0 : vector<1x8x32xf32> to vector<8x32xf32>
    %c0_2 = arith.constant 0 : index
    %c0_3 = arith.constant 0 : index
    %c0_4 = arith.constant 0 : index
    %2 = vector.load %arg2[%c0_2, %c0_3, %c0_4] : memref<1x8x32xf32, #tpu.memory_space<vmem>>, vector<1x8x32xf32>
    %3 = vector.shape_cast %2 : vector<1x8x32xf32> to vector<8x32xf32>
    %c0_5 = arith.constant 0 : index
    %c0_6 = arith.constant 0 : index
    %4 = vector.load %arg3[%c0_5, %c0_6] : memref<32x32xf32, #tpu.memory_space<vmem>>, vector<32x32xf32>
    %cst = arith.constant dense<0.000000e+00> : vector<8x32xf32>
    %5 = tpu.matmul %1, %4, %cst {dimension_numbers = #tpu.dot_dimension_numbers<[1], [0], [0], [1], [0, 0, 1, 1], [], []>} : vector<8x32xf32>, vector<32x32xf32>, vector<8x32xf32> -> vector<8x32xf32>
    %c0_7 = arith.constant 0 : index
    %c0_8 = arith.constant 0 : index
    %6 = vector.load %arg4[%c0_7, %c0_8] : memref<1x32xf32, #tpu.memory_space<vmem>>, vector<1x32xf32>
    %7 = vector.broadcast %6 : vector<1x32xf32> to vector<8x32xf32>
    %8 = arith.addf %5, %7 : vector<8x32xf32>
    %c0_9 = arith.constant 0 : index
    %c0_10 = arith.constant 0 : index
    %9 = vector.load %arg5[%c0_9, %c0_10] : memref<32x64xf32, #tpu.memory_space<vmem>>, vector<32x64xf32>
    %cst_11 = arith.constant dense<0.000000e+00> : vector<8x64xf32>
    %10 = tpu.matmul %3, %9, %cst_11 {dimension_numbers = #tpu.dot_dimension_numbers<[1], [0], [0], [1], [0, 0, 1, 1], [], []>} : vector<8x32xf32>, vector<32x64xf32>, vector<8x64xf32> -> vector<8x64xf32>
    %c0_12 = arith.constant 0 : index
    %c0_13 = arith.constant 0 : index
    %11 = vector.load %arg6[%c0_12, %c0_13] : memref<1x64xf32, #tpu.memory_space<vmem>>, vector<1x64xf32>
    %12 = vector.broadcast %11 : vector<1x64xf32> to vector<8x64xf32>
    %13 = arith.addf %10, %12 : vector<8x64xf32>
    %cst_14 = arith.constant 0.000000e+00 : f32
    %14 = vector.broadcast %cst_14 : f32 to vector<8x32xf32>
    %15 = vector.extract_strided_slice %8 {offsets = [0, 0], sizes = [8, 8], strides = [1, 1]} : vector<8x32xf32> to vector<8x8xf32>
    %16 = vector.extract_strided_slice %13 {offsets = [0, 0], sizes = [8, 8], strides = [1, 1]} : vector<8x64xf32> to vector<8x8xf32>
    %17 = vector.extract_strided_slice %13 {offsets = [0, 32], sizes = [8, 8], strides = [1, 1]} : vector<8x64xf32> to vector<8x8xf32>
    %cst_15 = arith.constant dense<0.000000e+00> : vector<8x8xf32>
    %18 = tpu.matmul %15, %16, %cst_15 {dimension_numbers = #tpu.dot_dimension_numbers<[1], [1], [0], [0], [0, 0, 1, 0], [], []>} : vector<8x8xf32>, vector<8x8xf32>, vector<8x8xf32> -> vector<8x8xf32>
    %cst_16 = arith.constant dense<0xFF800000> : vector<8xf32>
    %19 = vector.multi_reduction <maximumf>, %18, %cst_16 [1] : vector<8x8xf32> to vector<8xf32>
    %20 = vector.shape_cast %19 : vector<8xf32> to vector<8x1xf32>
    %21 = vector.broadcast %20 : vector<8x1xf32> to vector<8x8xf32>
    %22 = arith.subf %18, %21 : vector<8x8xf32>
    %23 = math.exp %22 : vector<8x8xf32>
    %cst_17 = arith.constant dense<0.000000e+00> : vector<8xf32>
    %24 = vector.multi_reduction <add>, %23, %cst_17 [1] : vector<8x8xf32> to vector<8xf32>
    %25 = vector.shape_cast %24 : vector<8xf32> to vector<8x1xf32>
    %26 = tpu.reciprocal %25 {approx = true} : vector<8x1xf32> -> vector<8x1xf32>
    %27 = vector.broadcast %26 : vector<8x1xf32> to vector<8x8xf32>
    %28 = arith.mulf %23, %27 : vector<8x8xf32>
    %cst_18 = arith.constant dense<0.000000e+00> : vector<8x8xf32>
    %29 = tpu.matmul %28, %17, %cst_18 {dimension_numbers = #tpu.dot_dimension_numbers<[1], [0], [0], [1], [0, 0, 1, 1], [], []>} : vector<8x8xf32>, vector<8x8xf32>, vector<8x8xf32> -> vector<8x8xf32>
    %c0_19 = arith.constant 0 : index
    %c0_20 = arith.constant 0 : index
    %30 = vector.load %arg7[%c0_19, %c0_20] : memref<32x32xf32, #tpu.memory_space<vmem>>, vector<8x32xf32>
    %cst_21 = arith.constant dense<0.000000e+00> : vector<8x32xf32>
    %31 = tpu.matmul %29, %30, %cst_21 {dimension_numbers = #tpu.dot_dimension_numbers<[1], [0], [0], [1], [0, 0, 1, 1], [], []>} : vector<8x8xf32>, vector<8x32xf32>, vector<8x32xf32> -> vector<8x32xf32>
    %32 = arith.addf %14, %31 : vector<8x32xf32>
    %33 = vector.extract_strided_slice %8 {offsets = [0, 8], sizes = [8, 8], strides = [1, 1]} : vector<8x32xf32> to vector<8x8xf32>
    %34 = vector.extract_strided_slice %13 {offsets = [0, 8], sizes = [8, 8], strides = [1, 1]} : vector<8x64xf32> to vector<8x8xf32>
    %35 = vector.extract_strided_slice %13 {offsets = [0, 40], sizes = [8, 8], strides = [1, 1]} : vector<8x64xf32> to vector<8x8xf32>
    %cst_22 = arith.constant dense<0.000000e+00> : vector<8x8xf32>
    %36 = tpu.matmul %33, %34, %cst_22 {dimension_numbers = #tpu.dot_dimension_numbers<[1], [1], [0], [0], [0, 0, 1, 0], [], []>} : vector<8x8xf32>, vector<8x8xf32>, vector<8x8xf32> -> vector<8x8xf32>
    %cst_23 = arith.constant dense<0xFF800000> : vector<8xf32>
    %37 = vector.multi_reduction <maximumf>, %36, %cst_23 [1] : vector<8x8xf32> to vector<8xf32>
    %38 = vector.shape_cast %37 : vector<8xf32> to vector<8x1xf32>
    %39 = vector.broadcast %38 : vector<8x1xf32> to vector<8x8xf32>
    %40 = arith.subf %36, %39 : vector<8x8xf32>
    %41 = math.exp %40 : vector<8x8xf32>
    %cst_24 = arith.constant dense<0.000000e+00> : vector<8xf32>
    %42 = vector.multi_reduction <add>, %41, %cst_24 [1] : vector<8x8xf32> to vector<8xf32>
    %43 = vector.shape_cast %42 : vector<8xf32> to vector<8x1xf32>
    %44 = tpu.reciprocal %43 {approx = true} : vector<8x1xf32> -> vector<8x1xf32>
    %45 = vector.broadcast %44 : vector<8x1xf32> to vector<8x8xf32>
    %46 = arith.mulf %41, %45 : vector<8x8xf32>
    %cst_25 = arith.constant dense<0.000000e+00> : vector<8x8xf32>
    %47 = tpu.matmul %46, %35, %cst_25 {dimension_numbers = #tpu.dot_dimension_numbers<[1], [0], [0], [1], [0, 0, 1, 1], [], []>} : vector<8x8xf32>, vector<8x8xf32>, vector<8x8xf32> -> vector<8x8xf32>
    %c8 = arith.constant 8 : index
    %c0_26 = arith.constant 0 : index
    %48 = vector.load %arg7[%c8, %c0_26] : memref<32x32xf32, #tpu.memory_space<vmem>>, vector<8x32xf32>
    %cst_27 = arith.constant dense<0.000000e+00> : vector<8x32xf32>
    %49 = tpu.matmul %47, %48, %cst_27 {dimension_numbers = #tpu.dot_dimension_numbers<[1], [0], [0], [1], [0, 0, 1, 1], [], []>} : vector<8x8xf32>, vector<8x32xf32>, vector<8x32xf32> -> vector<8x32xf32>
    %50 = arith.addf %32, %49 : vector<8x32xf32>
    %51 = vector.extract_strided_slice %8 {offsets = [0, 16], sizes = [8, 8], strides = [1, 1]} : vector<8x32xf32> to vector<8x8xf32>
    %52 = vector.extract_strided_slice %13 {offsets = [0, 16], sizes = [8, 8], strides = [1, 1]} : vector<8x64xf32> to vector<8x8xf32>
    %53 = vector.extract_strided_slice %13 {offsets = [0, 48], sizes = [8, 8], strides = [1, 1]} : vector<8x64xf32> to vector<8x8xf32>
    %cst_28 = arith.constant dense<0.000000e+00> : vector<8x8xf32>
    %54 = tpu.matmul %51, %52, %cst_28 {dimension_numbers = #tpu.dot_dimension_numbers<[1], [1], [0], [0], [0, 0, 1, 0], [], []>} : vector<8x8xf32>, vector<8x8xf32>, vector<8x8xf32> -> vector<8x8xf32>
    %cst_29 = arith.constant dense<0xFF800000> : vector<8xf32>
    %55 = vector.multi_reduction <maximumf>, %54, %cst_29 [1] : vector<8x8xf32> to vector<8xf32>
    %56 = vector.shape_cast %55 : vector<8xf32> to vector<8x1xf32>
    %57 = vector.broadcast %56 : vector<8x1xf32> to vector<8x8xf32>
    %58 = arith.subf %54, %57 : vector<8x8xf32>
    %59 = math.exp %58 : vector<8x8xf32>
    %cst_30 = arith.constant dense<0.000000e+00> : vector<8xf32>
    %60 = vector.multi_reduction <add>, %59, %cst_30 [1] : vector<8x8xf32> to vector<8xf32>
    %61 = vector.shape_cast %60 : vector<8xf32> to vector<8x1xf32>
    %62 = tpu.reciprocal %61 {approx = true} : vector<8x1xf32> -> vector<8x1xf32>
    %63 = vector.broadcast %62 : vector<8x1xf32> to vector<8x8xf32>
    %64 = arith.mulf %59, %63 : vector<8x8xf32>
    %cst_31 = arith.constant dense<0.000000e+00> : vector<8x8xf32>
    %65 = tpu.matmul %64, %53, %cst_31 {dimension_numbers = #tpu.dot_dimension_numbers<[1], [0], [0], [1], [0, 0, 1, 1], [], []>} : vector<8x8xf32>, vector<8x8xf32>, vector<8x8xf32> -> vector<8x8xf32>
    %c16 = arith.constant 16 : index
    %c0_32 = arith.constant 0 : index
    %66 = vector.load %arg7[%c16, %c0_32] : memref<32x32xf32, #tpu.memory_space<vmem>>, vector<8x32xf32>
    %cst_33 = arith.constant dense<0.000000e+00> : vector<8x32xf32>
    %67 = tpu.matmul %65, %66, %cst_33 {dimension_numbers = #tpu.dot_dimension_numbers<[1], [0], [0], [1], [0, 0, 1, 1], [], []>} : vector<8x8xf32>, vector<8x32xf32>, vector<8x32xf32> -> vector<8x32xf32>
    %68 = arith.addf %50, %67 : vector<8x32xf32>
    %69 = vector.extract_strided_slice %8 {offsets = [0, 24], sizes = [8, 8], strides = [1, 1]} : vector<8x32xf32> to vector<8x8xf32>
    %70 = vector.extract_strided_slice %13 {offsets = [0, 24], sizes = [8, 8], strides = [1, 1]} : vector<8x64xf32> to vector<8x8xf32>
    %71 = vector.extract_strided_slice %13 {offsets = [0, 56], sizes = [8, 8], strides = [1, 1]} : vector<8x64xf32> to vector<8x8xf32>
    %cst_34 = arith.constant dense<0.000000e+00> : vector<8x8xf32>
    %72 = tpu.matmul %69, %70, %cst_34 {dimension_numbers = #tpu.dot_dimension_numbers<[1], [1], [0], [0], [0, 0, 1, 0], [], []>} : vector<8x8xf32>, vector<8x8xf32>, vector<8x8xf32> -> vector<8x8xf32>
    %cst_35 = arith.constant dense<0xFF800000> : vector<8xf32>
    %73 = vector.multi_reduction <maximumf>, %72, %cst_35 [1] : vector<8x8xf32> to vector<8xf32>
    %74 = vector.shape_cast %73 : vector<8xf32> to vector<8x1xf32>
    %75 = vector.broadcast %74 : vector<8x1xf32> to vector<8x8xf32>
    %76 = arith.subf %72, %75 : vector<8x8xf32>
    %77 = math.exp %76 : vector<8x8xf32>
    %cst_36 = arith.constant dense<0.000000e+00> : vector<8xf32>
    %78 = vector.multi_reduction <add>, %77, %cst_36 [1] : vector<8x8xf32> to vector<8xf32>
    %79 = vector.shape_cast %78 : vector<8xf32> to vector<8x1xf32>
    %80 = tpu.reciprocal %79 {approx = true} : vector<8x1xf32> -> vector<8x1xf32>
    %81 = vector.broadcast %80 : vector<8x1xf32> to vector<8x8xf32>
    %82 = arith.mulf %77, %81 : vector<8x8xf32>
    %cst_37 = arith.constant dense<0.000000e+00> : vector<8x8xf32>
    %83 = tpu.matmul %82, %71, %cst_37 {dimension_numbers = #tpu.dot_dimension_numbers<[1], [0], [0], [1], [0, 0, 1, 1], [], []>} : vector<8x8xf32>, vector<8x8xf32>, vector<8x8xf32> -> vector<8x8xf32>
    %c24 = arith.constant 24 : index
    %c0_38 = arith.constant 0 : index
    %84 = vector.load %arg7[%c24, %c0_38] : memref<32x32xf32, #tpu.memory_space<vmem>>, vector<8x32xf32>
    %cst_39 = arith.constant dense<0.000000e+00> : vector<8x32xf32>
    %85 = tpu.matmul %83, %84, %cst_39 {dimension_numbers = #tpu.dot_dimension_numbers<[1], [0], [0], [1], [0, 0, 1, 1], [], []>} : vector<8x8xf32>, vector<8x32xf32>, vector<8x32xf32> -> vector<8x32xf32>
    %86 = arith.addf %68, %85 : vector<8x32xf32>
    %c0_40 = arith.constant 0 : index
    %c0_41 = arith.constant 0 : index
    %87 = vector.load %arg8[%c0_40, %c0_41] : memref<1x32xf32, #tpu.memory_space<vmem>>, vector<1x32xf32>
    %88 = vector.broadcast %87 : vector<1x32xf32> to vector<8x32xf32>
    %89 = arith.addf %86, %88 : vector<8x32xf32>
    %90 = arith.addf %89, %1 : vector<8x32xf32>
    %cst_42 = arith.constant dense<0.000000e+00> : vector<8xf32>
    %91 = vector.multi_reduction <add>, %90, %cst_42 [1] : vector<8x32xf32> to vector<8xf32>
    %92 = vector.shape_cast %91 : vector<8xf32> to vector<8x1xf32>
    %cst_43 = arith.constant 3.200000e+01 : f32
    %93 = vector.broadcast %cst_43 : f32 to vector<8x1xf32>
    %94 = arith.divf %92, %93 : vector<8x1xf32>
    %95 = vector.broadcast %94 : vector<8x1xf32> to vector<8x32xf32>
    %96 = arith.subf %90, %95 : vector<8x32xf32>
    %97 = arith.mulf %96, %96 : vector<8x32xf32>
    %cst_44 = arith.constant dense<0.000000e+00> : vector<8xf32>
    %98 = vector.multi_reduction <add>, %97, %cst_44 [1] : vector<8x32xf32> to vector<8xf32>
    %99 = vector.shape_cast %98 : vector<8xf32> to vector<8x1xf32>
    %cst_45 = arith.constant 3.200000e+01 : f32
    %100 = vector.broadcast %cst_45 : f32 to vector<8x1xf32>
    %101 = arith.divf %99, %100 : vector<8x1xf32>
    %102 = vector.broadcast %94 : vector<8x1xf32> to vector<8x32xf32>
    %103 = arith.subf %90, %102 : vector<8x32xf32>
    %cst_46 = arith.constant 9.99999974E-6 : f32
    %104 = vector.broadcast %cst_46 : f32 to vector<8x1xf32>
    %105 = arith.addf %101, %104 : vector<8x1xf32>
    %106 = math.rsqrt %105 : vector<8x1xf32>
    %107 = vector.broadcast %106 : vector<8x1xf32> to vector<8x32xf32>
    %108 = arith.mulf %103, %107 : vector<8x32xf32>
    %c0_47 = arith.constant 0 : index
    %c0_48 = arith.constant 0 : index
    %109 = vector.load %arg9[%c0_47, %c0_48] : memref<1x32xf32, #tpu.memory_space<vmem>>, vector<1x32xf32>
    %110 = vector.broadcast %109 : vector<1x32xf32> to vector<8x32xf32>
    %111 = arith.mulf %108, %110 : vector<8x32xf32>
    %c0_49 = arith.constant 0 : index
    %c0_50 = arith.constant 0 : index
    %112 = vector.load %arg10[%c0_49, %c0_50] : memref<1x32xf32, #tpu.memory_space<vmem>>, vector<1x32xf32>
    %113 = vector.broadcast %112 : vector<1x32xf32> to vector<8x32xf32>
    %114 = arith.addf %111, %113 : vector<8x32xf32>
    %c0_51 = arith.constant 0 : index
    %c0_52 = arith.constant 0 : index
    %c0_53 = arith.constant 0 : index
    %115 = vector.load %arg11[%c0_51, %c0_52, %c0_53] : memref<1x8x32xf32, #tpu.memory_space<vmem>>, vector<1x8x32xf32>
    %116 = vector.shape_cast %115 : vector<1x8x32xf32> to vector<8x32xf32>
    %117 = vector.shape_cast %114 : vector<8x32xf32> to vector<1x8x32xf32>
    tpu.vector_store %arg11[%c0_51, %c0_52, %c0_53], %117 {strides = array<i32>} : memref<1x8x32xf32, #tpu.memory_space<vmem>>, vector<1x8x32xf32>,
    return
  }
  func.func @transform_0(%arg0: i32) -> (i32, i32, i32) {
    %c0_i32 = arith.constant 0 : i32
    %c0_i32_0 = arith.constant 0 : i32
    %c0_i32_1 = arith.constant 0 : i32
    return %arg0, %c0_i32, %c0_i32_0 : i32, i32, i32
  }
  func.func @transform_1(%arg0: i32) -> (i32, i32, i32) {
    %c0_i32 = arith.constant 0 : i32
    %c0_i32_0 = arith.constant 0 : i32
    %c0_i32_1 = arith.constant 0 : i32
    return %arg0, %c0_i32, %c0_i32_0 : i32, i32, i32
  }
  func.func @transform_2(%arg0: i32) -> (i32, i32) {
    %c0_i32 = arith.constant 0 : i32
    %c0_i32_0 = arith.constant 0 : i32
    %c0_i32_1 = arith.constant 0 : i32
    return %c0_i32, %c0_i32_0 : i32, i32
  }
  func.func @transform_3(%arg0: i32) -> (i32, i32) {
    %c0_i32 = arith.constant 0 : i32
    %c0_i32_0 = arith.constant 0 : i32
    %c0_i32_1 = arith.constant 0 : i32
    return %c0_i32, %c0_i32_0 : i32, i32
  }
  func.func @transform_4(%arg0: i32) -> (i32, i32) {
    %c0_i32 = arith.constant 0 : i32
    %c0_i32_0 = arith.constant 0 : i32
    %c0_i32_1 = arith.constant 0 : i32
    return %c0_i32, %c0_i32_0 : i32, i32
  }
  func.func @transform_5(%arg0: i32) -> (i32, i32) {
    %c0_i32 = arith.constant 0 : i32
    %c0_i32_0 = arith.constant 0 : i32
    %c0_i32_1 = arith.constant 0 : i32
    return %c0_i32, %c0_i32_0 : i32, i32
  }
  func.func @transform_6(%arg0: i32) -> (i32, i32) {
    %c0_i32 = arith.constant 0 : i32
    %c0_i32_0 = arith.constant 0 : i32
    %c0_i32_1 = arith.constant 0 : i32
    return %c0_i32, %c0_i32_0 : i32, i32
  }
  func.func @transform_7(%arg0: i32) -> (i32, i32) {
    %c0_i32 = arith.constant 0 : i32
    %c0_i32_0 = arith.constant 0 : i32
    %c0_i32_1 = arith.constant 0 : i32
    return %c0_i32, %c0_i32_0 : i32, i32
  }
  func.func @transform_8(%arg0: i32) -> (i32, i32) {
    %c0_i32 = arith.constant 0 : i32
    %c0_i32_0 = arith.constant 0 : i32
    %c0_i32_1 = arith.constant 0 : i32
    return %c0_i32, %c0_i32_0 : i32, i32
  }
  func.func @transform_9(%arg0: i32) -> (i32, i32) {
    %c0_i32 = arith.constant 0 : i32
    %c0_i32_0 = arith.constant 0 : i32
    %c0_i32_1 = arith.constant 0 : i32
    return %c0_i32, %c0_i32_0 : i32, i32
  }
  func.func @transform_10(%arg0: i32) -> (i32, i32, i32) {
    %c0_i32 = arith.constant 0 : i32
    %c0_i32_0 = arith.constant 0 : i32
    %c0_i32_1 = arith.constant 0 : i32
    return %arg0, %c0_i32, %c0_i32_0 : i32, i32, i32
  }
}

module attributes {stable_mosaic.version = 11 : i64} {
  func.func @_matmul_bias_kernel(%arg0: i32, %arg1: i32, %arg2: i32, %arg3: memref<16x32xf32, #tpu.memory_space<vmem>>, %arg4: memref<32x128xf32, #tpu.memory_space<vmem>>, %arg5: memref<1x128xf32, #tpu.memory_space<vmem>>, %arg6: memref<16x128xf32, #tpu.memory_space<vmem>>, %arg7: memref<16x128xf32, #tpu.memory_space<vmem>>) attributes {dimension_semantics = [#tpu.dimension_semantics<parallel>, #tpu.dimension_semantics<parallel>, #tpu.dimension_semantics<arbitrary>], iteration_bounds = array<i64: 1, 1, 1>, scalar_prefetch = 0 : i64, scratch_operands = 1 : i64, tpu.core_type = #tpu.core_type<tc>, window_params = [{transform_indices = @transform_0, window_bounds = array<i64: 16, 32>}, {transform_indices = @transform_1, window_bounds = array<i64: 32, 128>}, {transform_indices = @transform_2, window_bounds = array<i64: 1, 128>}, {transform_indices = @transform_3, window_bounds = array<i64: 16, 128>}]} {
    %c0_i32 = arith.constant 0 : i32
    %0 = arith.cmpi eq, %arg2, %c0_i32 : i32
    %1 = arith.extui %0 : i1 to i32
    %c0_i32_0 = arith.constant 0 : i32
    %2 = arith.cmpi ne, %1, %c0_i32_0 : i32
    scf.if %2 {
      %cst_10 = arith.constant 0.000000e+00 : f32
      %12 = vector.broadcast %cst_10 : f32 to vector<16x128xf32>
      %c0_11 = arith.constant 0 : index
      %c0_12 = arith.constant 0 : index
      %13 = vector.load %arg7[%c0_11, %c0_12] : memref<16x128xf32, #tpu.memory_space<vmem>>, vector<16x128xf32>
      tpu.vector_store %arg7[%c0_11, %c0_12], %12 {strides = array<i32>} : memref<16x128xf32, #tpu.memory_space<vmem>>, vector<16x128xf32>,
    } else {
    }
    %c0 = arith.constant 0 : index
    %c0_1 = arith.constant 0 : index
    %3 = vector.load %arg7[%c0, %c0_1] : memref<16x128xf32, #tpu.memory_space<vmem>>, vector<16x128xf32>
    %c0_2 = arith.constant 0 : index
    %c0_3 = arith.constant 0 : index
    %4 = vector.load %arg3[%c0_2, %c0_3] : memref<16x32xf32, #tpu.memory_space<vmem>>, vector<16x32xf32>
    %c0_4 = arith.constant 0 : index
    %c0_5 = arith.constant 0 : index
    %5 = vector.load %arg4[%c0_4, %c0_5] : memref<32x128xf32, #tpu.memory_space<vmem>>, vector<32x128xf32>
    %cst = arith.constant dense<0.000000e+00> : vector<16x128xf32>
    %6 = tpu.matmul %4, %5, %cst {dimension_numbers = #tpu.dot_dimension_numbers<[1], [0], [0], [1], [0, 0, 1, 1], [], []>} : vector<16x32xf32>, vector<32x128xf32>, vector<16x128xf32> -> vector<16x128xf32>
    %7 = arith.addf %3, %6 : vector<16x128xf32>
    %c0_6 = arith.constant 0 : index
    %c0_7 = arith.constant 0 : index
    %8 = vector.load %arg7[%c0_6, %c0_7] : memref<16x128xf32, #tpu.memory_space<vmem>>, vector<16x128xf32>
    tpu.vector_store %arg7[%c0_6, %c0_7], %7 {strides = array<i32>} : memref<16x128xf32, #tpu.memory_space<vmem>>, vector<16x128xf32>,
    %c0_i32_8 = arith.constant 0 : i32
    %9 = arith.cmpi eq, %arg2, %c0_i32_8 : i32
    %10 = arith.extui %9 : i1 to i32
    %c0_i32_9 = arith.constant 0 : i32
    %11 = arith.cmpi ne, %10, %c0_i32_9 : i32
    scf.if %11 {
      %c0_10 = arith.constant 0 : index
      %c0_11 = arith.constant 0 : index
      %12 = vector.load %arg7[%c0_10, %c0_11] : memref<16x128xf32, #tpu.memory_space<vmem>>, vector<16x128xf32>
      %c0_12 = arith.constant 0 : index
      %c0_13 = arith.constant 0 : index
      %13 = vector.load %arg5[%c0_12, %c0_13] : memref<1x128xf32, #tpu.memory_space<vmem>>, vector<1x128xf32>
      %14 = vector.broadcast %13 : vector<1x128xf32> to vector<16x128xf32>
      %15 = arith.addf %12, %14 : vector<16x128xf32>
      %c0_14 = arith.constant 0 : index
      %c0_15 = arith.constant 0 : index
      %16 = vector.load %arg6[%c0_14, %c0_15] : memref<16x128xf32, #tpu.memory_space<vmem>>, vector<16x128xf32>
      tpu.vector_store %arg6[%c0_14, %c0_15], %15 {strides = array<i32>} : memref<16x128xf32, #tpu.memory_space<vmem>>, vector<16x128xf32>,
    } else {
    }
    return
  }
  func.func @transform_0(%arg0: i32, %arg1: i32, %arg2: i32) -> (i32, i32) {
    %c0_i32 = arith.constant 0 : i32
    return %arg0, %arg2 : i32, i32
  }
  func.func @transform_1(%arg0: i32, %arg1: i32, %arg2: i32) -> (i32, i32) {
    %c0_i32 = arith.constant 0 : i32
    return %arg2, %arg1 : i32, i32
  }
  func.func @transform_2(%arg0: i32, %arg1: i32, %arg2: i32) -> (i32, i32) {
    %c0_i32 = arith.constant 0 : i32
    %c0_i32_0 = arith.constant 0 : i32
    return %c0_i32, %arg1 : i32, i32
  }
  func.func @transform_3(%arg0: i32, %arg1: i32, %arg2: i32) -> (i32, i32) {
    %c0_i32 = arith.constant 0 : i32
    return %arg0, %arg1 : i32, i32
  }
}

</mosaic_0001>

<llo_original>
// kernel: transformer_forward.21
$region0: #{transformer_forward.21}
  #allocation0 [shape = 'u32[]', space=smem, size = 0x4, offset = 0x4, fixed_abs, tag = 'smem constant byte address 0x4 - core index']
  #allocation1 [shape = 'u32[144,128]{1,0:T(1,128)}', space=vmem, size = 0x12000, scoped, tag = 'internal scratch']
  #allocation2 [shape = 'f32[16,128]{1,0:T(8,128)}', space=vmem, size = 0x2000, scoped, tag = 'scratch operand']
  %s0 = inlined_call_operand.vmem [shape: f32[16,32], index: 0, kind: input, shape index: {}]
  %s1 = inlined_call_operand.vmem [shape: f32[32,128], index: 1, kind: input, shape index: {}]
  %s2 = inlined_call_operand.vmem [shape: f32[1,128], index: 2, kind: input, shape index: {}]
  %s3 = inlined_call_operand.vmem [shape: f32[16,128], index: 3, kind: output, shape index: {}]
  %s4 = sld [smem:[#allocation0]]
  $region30: #{transformer_forward.21} parent=0
    _
  %s6 = ssub.s32 1, %s4
  %s7 = scalar_select 0, %s6, %s4
  // Predicated region
  $region2: #{transformer_forward.21} parent=0 // pred_check
    _
  $region3: #{transformer_forward.21} parent=0 // pred_check_branch
    %9 = sbr.rel (0) target = $region5
  $region4: #{transformer_forward.21} parent=0 // pred_region
    _
  $region5: #{transformer_forward.21} parent=0 // pred_fallthru
    _
  // Predicated region
  $region6: #{transformer_forward.21} parent=0 // pred_check
    _
  $region7: #{transformer_forward.21} parent=0 // pred_check_branch
    %11 = sbr.rel (0) target = $region9
  $region8: #{transformer_forward.21} parent=0 // pred_region
    _
  $region9: #{transformer_forward.21} parent=0 // pred_fallthru
    _
  // Predicated region
  $region10: #{transformer_forward.21} parent=0 // pred_check
    _
  $region11: #{transformer_forward.21} parent=0 // pred_check_branch
    %13 = sbr.rel (0) target = $region13
  $region12: #{transformer_forward.21} parent=0 // pred_region
    _
  $region13: #{transformer_forward.21} parent=0 // pred_fallthru
    _
  %p14 = scmp.eq.s32.totalorder 0, 0
  // Predicated region
  $region14: #{transformer_forward.21} parent=0 // pred_check
    %p15 = pneg %p14
  $region15: #{transformer_forward.21} parent=0 // pred_check_branch
    %17 = sbr.rel (%p15) target = $region17
  $region16: #{transformer_forward.21} parent=0 // pred_region
    %18 = vst [vmem:[#allocation2] sm:$0xff] 0.0
    %19 = vst [vmem:[#allocation2 + $0x8] sm:$0xff] 0.0
  $region17: #{transformer_forward.21} parent=0 // pred_fallthru
    _
  %v20 = vld [vmem:[#allocation2] sm:$0xff]
  %v21 = vld [vmem:[#allocation2 + $0x8] sm:$0xff]
  %v22 = vld [vmem:[%s0] sm:$0xff]
  %v23 = vld [vmem:[%s0 + $0x8] sm:$0xff]
  %v24 = vld [vmem:[%s1] sm:$0xff]
  %v25 = vld [vmem:[%s1 + $0x8] sm:$0xff]
  %v26 = vld [vmem:[%s1 + $0x10] sm:$0xff]
  %v27 = vld [vmem:[%s1 + $0x18] sm:$0xff]
  %vm28 = vcmask 261120
  %v30 = vsel %vm28, %v22, 0
  %v33 = vsel %vm28, %v23, 0
  %35 = vmatprep.subr.mxu0 0.0
  %36 = vmatpush1.msra.mxu0 %v24
  %37 = vmatprep.subr.mxu0 0.0
  %38 = vmatpush1.msra.mxu0 %v25
  %39 = vmatprep.subr.mxu0 0.0
  %40 = vmatpush1.msra.mxu0 %v26
  %41 = vmatprep.subr.mxu0 0.0
  %42 = vmatpush1.msra.mxu0 %v27
  %43 = vmatprep.subr.mxu0 0.0
  %44 = vmatpush1.msra.mxu0 0.0
  %45 = vmatprep.subr.mxu0 0.0
  %46 = vmatpush1.msra.mxu0 0.0
  %47 = vmatprep.subr.mxu0 0.0
  %48 = vmatpush1.msra.mxu0 0.0
  %49 = vmatprep.subr.mxu0 0.0
  %50 = vmatpush1.msra.mxu0 0.0
  %51 = vmatprep.subr.mxu0 0.0
  %52 = vmatpush1.msra.mxu0 0.0
  %53 = vmatprep.subr.mxu0 0.0
  %54 = vmatpush1.msra.mxu0 0.0
  %55 = vmatprep.subr.mxu0 0.0
  %56 = vmatpush1.msra.mxu0 0.0
  %57 = vmatprep.subr.mxu0 0.0
  %58 = vmatpush1.msra.mxu0 0.0
  %59 = vmatprep.subr.mxu0 0.0
  %60 = vmatpush1.msra.mxu0 0.0
  %61 = vmatprep.subr.mxu0 0.0
  %62 = vmatpush1.msra.mxu0 0.0
  %63 = vmatprep.subr.mxu0 0.0
  %64 = vmatpush1.msra.mxu0 0.0
  %65 = vmatprep.subr.mxu0 0.0
  %66 = vmatpush1.msra.mxu0 0.0
  %67 = vmatprep.subr.mxu0 0.0
  %68 = vmatpush1.msra.mxu0 0.0
  %69 = vmatprep.subr.mxu0 0.0
  %70 = vmatpush1.msra.mxu0 0.0
  %71 = vmatprep.subr.mxu0 0.0
  %72 = vmatpush1.msra.mxu0 0.0
  %73 = vmatprep.subr.mxu0 0.0
  %74 = vmatpush1.msra.mxu0 0.0
  %75 = vmatprep.subr.mxu0 0.0
  %76 = vmatpush1.msra.mxu0 0.0
  %77 = vmatprep.subr.mxu0 0.0
  %78 = vmatpush1.msra.mxu0 0.0
  %79 = vmatprep.subr.mxu0 0.0
  %80 = vmatpush1.msra.mxu0 0.0
  %81 = vmatprep.subr.mxu0 0.0
  %82 = vmatpush1.msra.mxu0 0.0
  %83 = vmatprep.subr.mxu0 0.0
  %84 = vmatpush1.msra.mxu0 0.0
  %85 = vmatprep.subr.mxu0 0.0
  %86 = vmatpush1.msra.mxu0 0.0
  %87 = vmatprep.subr.mxu0 0.0
  %88 = vmatpush1.msra.mxu0 0.0
  %89 = vmatprep.subr.mxu0 0.0
  %90 = vmatpush1.msra.mxu0 0.0
  %91 = vmatprep.subr.mxu0 0.0
  %92 = vmatpush1.msra.mxu0 0.0
  %93 = vmatprep.subr.mxu0 0.0
  %94 = vmatpush1.msra.mxu0 0.0
  %95 = vmatprep.subr.mxu0 0.0
  %96 = vmatpush1.msra.mxu0 0.0
  %97 = vmatprep.subr.mxu0 0.0
  %98 = vmatpush1.msra.mxu0 0.0
  %99 = vmatprep.mubr.f32.mxu0 0.0
  %100 = vmatmul.mubr.f32.gmra.mrb[0].mxu0 %v30
  %v101 = vpop.f32.mrb[0].mxu0
  %v102 = vadd.f32 0.0, %v101
  %v103 = vpop.f32.mrb[0].mxu0
  %104 = vmatprep.mubr.f32.mxu0 0.0
  %105 = vmatmul.mubr.f32.gmra.mrb[0].mxu0 %v33
  %v106 = vpop.f32.mrb[0].mxu0
  %v107 = vadd.f32 0.0, %v106
  %v108 = vpop.f32.mrb[0].mxu0
  %109 = vdwg.mxu0
  %v110 = vadd.f32 %v20, %v102
  %v111 = vadd.f32 %v21, %v107
  %112 = vst [vmem:[#allocation2] sm:$0xff] %v110
  %113 = vst [vmem:[#allocation2 + $0x8] sm:$0xff] %v111
  // Predicated region
  $region18: #{transformer_forward.21} parent=0 // pred_check
    %p114 = pneg %p14
  $region19: #{transformer_forward.21} parent=0 // pred_check_branch
    %116 = sbr.rel (%p114) target = $region21
  $region20: #{transformer_forward.21} parent=0 // pred_region
    %v117 = vld [vmem:[#allocation2] sm:$0xff]
    %v118 = vld [vmem:[#allocation2 + $0x8] sm:$0xff]
    %v119 = vld [vmem:[%s2] sm:$0x1]
    %v121 = vlaneseq
    %v122 = vshrl.u32 %v121, 7
    %v123 = vsub.s32 0, %v122
    %v124 = vrot.slane %v119, %v123
    %v126 = vadd.f32 %v117, %v124
    %v127 = vadd.f32 %v118, %v124
    %128 = vst [vmem:[%s3] sm:$0xff] %v126
    %129 = vst [vmem:[%s3 + $0x8] sm:$0xff] %v127
  $region21: #{transformer_forward.21} parent=0 // pred_fallthru
    _
  // Predicated region
  $region22: #{transformer_forward.21} parent=0 // pred_check
    _
  $region23: #{transformer_forward.21} parent=0 // pred_check_branch
    %131 = sbr.rel (0) target = $region25
  $region24: #{transformer_forward.21} parent=0 // pred_region
    _
  $region25: #{transformer_forward.21} parent=0 // pred_fallthru
    _
  // Predicated region
  $region26: #{transformer_forward.21} parent=0 // pred_check
    _
  $region27: #{transformer_forward.21} parent=0 // pred_check_branch
    %133 = sbr.rel (0) target = $region29
  $region28: #{transformer_forward.21} parent=0 // pred_region
    _
  $region29: #{transformer_forward.21} parent=0 // pred_fallthru
    _

// kernel: transformer_forward.12
$region0: #{transformer_forward.12}
  #allocation0 [shape = 'u32[]', space=smem, size = 0x4, offset = 0x4, fixed_abs, tag = 'smem constant byte address 0x4 - core index']
  #allocation1 [shape = 'u32[144,128]{1,0:T(1,128)}', space=vmem, size = 0x12000, scoped, tag = 'internal scratch']
  %s0 = inlined_call_operand.vmem [shape: f32[16,32], index: 0, kind: input, shape index: {}]
  %s1 = inlined_call_operand.vmem [shape: f32[32,64], index: 1, kind: input, shape index: {}]
  %s2 = inlined_call_operand.vmem [shape: f32[1,64], index: 2, kind: input, shape index: {}]
  %s3 = inlined_call_operand.vmem [shape: f32[64,32], index: 3, kind: input, shape index: {}]
  %s4 = inlined_call_operand.vmem [shape: f32[1,32], index: 4, kind: input, shape index: {}]
  %s5 = inlined_call_operand.vmem [shape: f32[1,32], index: 5, kind: input, shape index: {}]
  %s6 = inlined_call_operand.vmem [shape: f32[1,32], index: 6, kind: input, shape index: {}]
  %s7 = inlined_call_operand.vmem [shape: f32[16,32], index: 7, kind: output, shape index: {}]
  %s8 = sld [smem:[#allocation0]]
  $region38: #{transformer_forward.12} parent=0
    _
  %s10 = ssub.s32 1, %s8
  %s11 = scalar_select 0, %s10, %s8
  // Predicated region
  $region2: #{transformer_forward.12} parent=0 // pred_check
    _
  $region3: #{transformer_forward.12} parent=0 // pred_check_branch
    %13 = sbr.rel (0) target = $region5
  $region4: #{transformer_forward.12} parent=0 // pred_region
    _
  $region5: #{transformer_forward.12} parent=0 // pred_fallthru
    _
  // Predicated region
  $region6: #{transformer_forward.12} parent=0 // pred_check
    _
  $region7: #{transformer_forward.12} parent=0 // pred_check_branch
    %15 = sbr.rel (0) target = $region9
  $region8: #{transformer_forward.12} parent=0 // pred_region
    _
  $region9: #{transformer_forward.12} parent=0 // pred_fallthru
    _
  // Predicated region
  $region10: #{transformer_forward.12} parent=0 // pred_check
    _
  $region11: #{transformer_forward.12} parent=0 // pred_check_branch
    %17 = sbr.rel (0) target = $region13
  $region12: #{transformer_forward.12} parent=0 // pred_region
    _
  $region13: #{transformer_forward.12} parent=0 // pred_fallthru
    _
  // Predicated region
  $region14: #{transformer_forward.12} parent=0 // pred_check
    _
  $region15: #{transformer_forward.12} parent=0 // pred_check_branch
    %19 = sbr.rel (0) target = $region17
  $region16: #{transformer_forward.12} parent=0 // pred_region
    _
  $region17: #{transformer_forward.12} parent=0 // pred_fallthru
    _
  // Predicated region
  $region18: #{transformer_forward.12} parent=0 // pred_check
    _
  $region19: #{transformer_forward.12} parent=0 // pred_check_branch
    %21 = sbr.rel (0) target = $region21
  $region20: #{transformer_forward.12} parent=0 // pred_region
    _
  $region21: #{transformer_forward.12} parent=0 // pred_fallthru
    _
  // Predicated region
  $region22: #{transformer_forward.12} parent=0 // pred_check
    _
  $region23: #{transformer_forward.12} parent=0 // pred_check_branch
    %23 = sbr.rel (0) target = $region25
  $region24: #{transformer_forward.12} parent=0 // pred_region
    _
  $region25: #{transformer_forward.12} parent=0 // pred_fallthru
    _
  // Predicated region
  $region26: #{transformer_forward.12} parent=0 // pred_check
    _
  $region27: #{transformer_forward.12} parent=0 // pred_check_branch
    %25 = sbr.rel (0) target = $region29
  $region28: #{transformer_forward.12} parent=0 // pred_region
    _
  $region29: #{transformer_forward.12} parent=0 // pred_fallthru
    _
  %v26 = vld [vmem:[%s0] sm:$0xff]
  %v27 = vld [vmem:[%s0 + $0x8] sm:$0xff]
  %v28 = vld [vmem:[%s1] sm:$0xff]
  %v29 = vld [vmem:[%s1 + $0x8] sm:$0xff]
  %v30 = vld [vmem:[%s1 + $0x10] sm:$0xff]
  %v31 = vld [vmem:[%s1 + $0x18] sm:$0xff]
  %v32 = vld [vmem:[%s2] sm:$0x1]
  %v34 = vlaneseq
  %v35 = vshrl.u32 %v34, 7
  %v36 = vsub.s32 0, %v35
  %v37 = vrot.slane %v32, %v36
  %vm39 = vcmask 261120
  %v41 = vsel %vm39, %v26, 0
  %v44 = vsel %vm39, %v27, 0
  %46 = vmatprep.subr.mxu0 0.0
  %47 = vmatpush1.msra.mxu0 %v28
  %48 = vmatprep.subr.mxu0 0.0
  %49 = vmatpush1.msra.mxu0 %v29
  %50 = vmatprep.subr.mxu0 0.0
  %51 = vmatpush1.msra.mxu0 %v30
  %52 = vmatprep.subr.mxu0 0.0
  %53 = vmatpush1.msra.mxu0 %v31
  %54 = vmatprep.subr.mxu0 0.0
  %55 = vmatpush1.msra.mxu0 0.0
  %56 = vmatprep.subr.mxu0 0.0
  %57 = vmatpush1.msra.mxu0 0.0
  %58 = vmatprep.subr.mxu0 0.0
  %59 = vmatpush1.msra.mxu0 0.0
  %60 = vmatprep.subr.mxu0 0.0
  %61 = vmatpush1.msra.mxu0 0.0
  %62 = vmatprep.subr.mxu0 0.0
  %63 = vmatpush1.msra.mxu0 0.0
  %64 = vmatprep.subr.mxu0 0.0
  %65 = vmatpush1.msra.mxu0 0.0
  %66 = vmatprep.subr.mxu0 0.0
  %67 = vmatpush1.msra.mxu0 0.0
  %68 = vmatprep.subr.mxu0 0.0
  %69 = vmatpush1.msra.mxu0 0.0
  %70 = vmatprep.subr.mxu0 0.0
  %71 = vmatpush1.msra.mxu0 0.0
  %72 = vmatprep.subr.mxu0 0.0
  %73 = vmatpush1.msra.mxu0 0.0
  %74 = vmatprep.subr.mxu0 0.0
  %75 = vmatpush1.msra.mxu0 0.0
  %76 = vmatprep.subr.mxu0 0.0
  %77 = vmatpush1.msra.mxu0 0.0
  %78 = vmatprep.subr.mxu0 0.0
  %79 = vmatpush1.msra.mxu0 0.0
  %80 = vmatprep.subr.mxu0 0.0
  %81 = vmatpush1.msra.mxu0 0.0
  %82 = vmatprep.subr.mxu0 0.0
  %83 = vmatpush1.msra.mxu0 0.0
  %84 = vmatprep.subr.mxu0 0.0
  %85 = vmatpush1.msra.mxu0 0.0
  %86 = vmatprep.subr.mxu0 0.0
  %87 = vmatpush1.msra.mxu0 0.0
  %88 = vmatprep.subr.mxu0 0.0
  %89 = vmatpush1.msra.mxu0 0.0
  %90 = vmatprep.subr.mxu0 0.0
  %91 = vmatpush1.msra.mxu0 0.0
  %92 = vmatprep.subr.mxu0 0.0
  %93 = vmatpush1.msra.mxu0 0.0
  %94 = vmatprep.subr.mxu0 0.0
  %95 = vmatpush1.msra.mxu0 0.0
  %96 = vmatprep.subr.mxu0 0.0
  %97 = vmatpush1.msra.mxu0 0.0
  %98 = vmatprep.subr.mxu0 0.0
  %99 = vmatpush1.msra.mxu0 0.0
  %100 = vmatprep.subr.mxu0 0.0
  %101 = vmatpush1.msra.mxu0 0.0
  %102 = vmatprep.subr.mxu0 0.0
  %103 = vmatpush1.msra.mxu0 0.0
  %104 = vmatprep.subr.mxu0 0.0
  %105 = vmatpush1.msra.mxu0 0.0
  %106 = vmatprep.subr.mxu0 0.0
  %107 = vmatpush1.msra.mxu0 0.0
  %108 = vmatprep.subr.mxu0 0.0
  %109 = vmatpush1.msra.mxu0 0.0
  %110 = vmatprep.mubr.f32.mxu0 0.0
  %111 = vmatmul.mubr.f32.gmra.mrb[0].mxu0 %v41
  %v112 = vpop.f32.mrb[0].mxu0
  %v113 = vadd.f32 %v37, %v112
  %v114 = vpop.f32.mrb[0].mxu0
  %115 = vmatprep.mubr.f32.mxu0 0.0
  %116 = vmatmul.mubr.f32.gmra.mrb[0].mxu0 %v44
  %v117 = vpop.f32.mrb[0].mxu0
  %v118 = vadd.f32 %v37, %v117
  %v119 = vpop.f32.mrb[0].mxu0
  %120 = vdwg.mxu0
  %v121 = vmax.f32 %v113, 0.0
  %v122 = vmax.f32 %v118, 0.0
  %v123 = vld [vmem:[%s3] sm:$0xff]
  %v124 = vld [vmem:[%s3 + $0x8] sm:$0xff]
  %v125 = vld [vmem:[%s3 + $0x10] sm:$0xff]
  %v126 = vld [vmem:[%s3 + $0x18] sm:$0xff]
  %v127 = vld [vmem:[%s3 + $0x20] sm:$0xff]
  %v128 = vld [vmem:[%s3 + $0x28] sm:$0xff]
  %v129 = vld [vmem:[%s3 + $0x30] sm:$0xff]
  %v130 = vld [vmem:[%s3 + $0x38] sm:$0xff]
  %v131 = vld [vmem:[%s4] sm:$0x1]
  %v133 = vlaneseq
  %v134 = vshrl.u32 %v133, 7
  %v135 = vsub.s32 0, %v134
  %v136 = vrot.slane %v131, %v135
  %vm138 = vcmask 523264
  %v140 = vsel %vm138, %v121, 0
  %v143 = vsel %vm138, %v122, 0
  %145 = vmatprep.subr.mxu0 0.0
  %146 = vmatpush1.msra.mxu0 %v123
  %147 = vmatprep.subr.mxu0 0.0
  %148 = vmatpush1.msra.mxu0 %v124
  %149 = vmatprep.subr.mxu0 0.0
  %150 = vmatpush1.msra.mxu0 %v125
  %151 = vmatprep.subr.mxu0 0.0
  %152 = vmatpush1.msra.mxu0 %v126
  %153 = vmatprep.subr.mxu0 0.0
  %154 = vmatpush1.msra.mxu0 %v127
  %155 = vmatprep.subr.mxu0 0.0
  %156 = vmatpush1.msra.mxu0 %v128
  %157 = vmatprep.subr.mxu0 0.0
  %158 = vmatpush1.msra.mxu0 %v129
  %159 = vmatprep.subr.mxu0 0.0
  %160 = vmatpush1.msra.mxu0 %v130
  %161 = vmatprep.subr.mxu0 0.0
  %162 = vmatpush1.msra.mxu0 0.0
  %163 = vmatprep.subr.mxu0 0.0
  %164 = vmatpush1.msra.mxu0 0.0
  %165 = vmatprep.subr.mxu0 0.0
  %166 = vmatpush1.msra.mxu0 0.0
  %167 = vmatprep.subr.mxu0 0.0
  %168 = vmatpush1.msra.mxu0 0.0
  %169 = vmatprep.subr.mxu0 0.0
  %170 = vmatpush1.msra.mxu0 0.0
  %171 = vmatprep.subr.mxu0 0.0
  %172 = vmatpush1.msra.mxu0 0.0
  %173 = vmatprep.subr.mxu0 0.0
  %174 = vmatpush1.msra.mxu0 0.0
  %175 = vmatprep.subr.mxu0 0.0
  %176 = vmatpush1.msra.mxu0 0.0
  %177 = vmatprep.subr.mxu0 0.0
  %178 = vmatpush1.msra.mxu0 0.0
  %179 = vmatprep.subr.mxu0 0.0
  %180 = vmatpush1.msra.mxu0 0.0
  %181 = vmatprep.subr.mxu0 0.0
  %182 = vmatpush1.msra.mxu0 0.0
  %183 = vmatprep.subr.mxu0 0.0
  %184 = vmatpush1.msra.mxu0 0.0
  %185 = vmatprep.subr.mxu0 0.0
  %186 = vmatpush1.msra.mxu0 0.0
  %187 = vmatprep.subr.mxu0 0.0
  %188 = vmatpush1.msra.mxu0 0.0
  %189 = vmatprep.subr.mxu0 0.0
  %190 = vmatpush1.msra.mxu0 0.0
  %191 = vmatprep.subr.mxu0 0.0
  %192 = vmatpush1.msra.mxu0 0.0
  %193 = vmatprep.subr.mxu0 0.0
  %194 = vmatpush1.msra.mxu0 0.0
  %195 = vmatprep.subr.mxu0 0.0
  %196 = vmatpush1.msra.mxu0 0.0
  %197 = vmatprep.subr.mxu0 0.0
  %198 = vmatpush1.msra.mxu0 0.0
  %199 = vmatprep.subr.mxu0 0.0
  %200 = vmatpush1.msra.mxu0 0.0
  %201 = vmatprep.subr.mxu0 0.0
  %202 = vmatpush1.msra.mxu0 0.0
  %203 = vmatprep.subr.mxu0 0.0
  %204 = vmatpush1.msra.mxu0 0.0
  %205 = vmatprep.subr.mxu0 0.0
  %206 = vmatpush1.msra.mxu0 0.0
  %207 = vmatprep.subr.mxu0 0.0
  %208 = vmatpush1.msra.mxu0 0.0
  %209 = vmatprep.mubr.f32.mxu0 0.0
  %210 = vmatmul.mubr.f32.gmra.mrb[0].mxu0 %v140
  %v211 = vpop.f32.mrb[0].mxu0
  %v212 = vadd.f32 %v136, %v211
  %v213 = vpop.f32.mrb[0].mxu0
  %214 = vmatprep.mubr.f32.mxu0 0.0
  %215 = vmatmul.mubr.f32.gmra.mrb[0].mxu0 %v143
  %v216 = vpop.f32.mrb[0].mxu0
  %v217 = vadd.f32 %v136, %v216
  %v218 = vpop.f32.mrb[0].mxu0
  %219 = vdwg.mxu0
  %v220 = vadd.f32 %v212, %v26
  %v221 = vadd.f32 %v217, %v27
  %v222 = vsel %vm39, %v220, 0.0
  %223 = vadd.xlane.f32.xlu0 %v222
  %v224 = vpop.xlane.xlu0 %223
  %v225 = vsel %vm39, %v221, 0.0
  %226 = vadd.xlane.f32.xlu0 %v225
  %v227 = vpop.xlane.xlu0 %226
  %v228 = vrcp.pop 32.0
  %v229 = vmul.f32 %v224, %v228
  %v230 = vmul.f32 %v227, %v228
  %v231 = vsub.f32 %v220, %v229
  %v232 = vsub.f32 %v221, %v230
  %v233 = vmul.f32 %v231, %v231
  %v234 = vmul.f32 %v232, %v232
  %v235 = vsel %vm39, %v233, 0.0
  %236 = vadd.xlane.f32.xlu0 %v235
  %v237 = vpop.xlane.xlu0 %236
  %v238 = vsel %vm39, %v234, 0.0
  %239 = vadd.xlane.f32.xlu0 %v238
  %v240 = vpop.xlane.xlu0 %239
  %v241 = vmul.f32 %v237, %v228
  %v242 = vmul.f32 %v240, %v228
  %v243 = vadd.f32 %v241, 1e-05
  %v244 = vadd.f32 %v242, 1e-05
  %v245 = vrsqrt.pop %v243
  %v246 = vrsqrt.pop %v244
  %v247 = vmul.f32 %v231, %v245
  %v248 = vmul.f32 %v232, %v246
  %v249 = vld [vmem:[%s5] sm:$0x1]
  %v251 = vlaneseq
  %v252 = vshrl.u32 %v251, 7
  %v253 = vsub.s32 0, %v252
  %v254 = vrot.slane %v249, %v253
  %v256 = vmul.f32 %v247, %v254
  %v257 = vmul.f32 %v248, %v254
  %v258 = vld [vmem:[%s6] sm:$0x1]
  %v260 = vlaneseq
  %v261 = vshrl.u32 %v260, 7
  %v262 = vsub.s32 0, %v261
  %v263 = vrot.slane %v258, %v262
  %v265 = vadd.f32 %v256, %v263
  %v266 = vadd.f32 %v257, %v263
  %267 = vst.msk [vmem:[%s7] sm:$0xff] %vm39, %v265
  %268 = vst.msk [vmem:[%s7 + $0x8] sm:$0xff] %vm39, %v266
  // Predicated region
  $region30: #{transformer_forward.12} parent=0 // pred_check
    _
  $region31: #{transformer_forward.12} parent=0 // pred_check_branch
    %270 = sbr.rel (0) target = $region33
  $region32: #{transformer_forward.12} parent=0 // pred_region
    _
  $region33: #{transformer_forward.12} parent=0 // pred_fallthru
    _
  // Predicated region
  $region34: #{transformer_forward.12} parent=0 // pred_check
    _
  $region35: #{transformer_forward.12} parent=0 // pred_check_branch
    %272 = sbr.rel (0) target = $region37
  $region36: #{transformer_forward.12} parent=0 // pred_region
    _
  $region37: #{transformer_forward.12} parent=0 // pred_fallthru
    _

// kernel: transformer_forward.11
$region0: #{transformer_forward.11}
  #allocation0 [shape = 'u32[]', space=smem, size = 0x4, offset = 0x4, fixed_abs, tag = 'smem constant byte address 0x4 - core index']
  #allocation1 [shape = 'u32[144,128]{1,0:T(1,128)}', space=vmem, size = 0x12000, scoped, tag = 'internal scratch']
  %s0 = inlined_call_operand.vmem [shape: f32[2,8,32], index: 0, kind: input, shape index: {}, may-alias: {0,1}]
  %s1 = inlined_call_operand.vmem [shape: f32[2,8,32], index: 1, kind: input, shape index: {}, may-alias: {0,1}]
  %s2 = inlined_call_operand.vmem [shape: f32[32,32], index: 2, kind: input, shape index: {}]
  %s3 = inlined_call_operand.vmem [shape: f32[1,32], index: 3, kind: input, shape index: {}]
  %s4 = inlined_call_operand.vmem [shape: f32[32,64], index: 4, kind: input, shape index: {}]
  %s5 = inlined_call_operand.vmem [shape: f32[1,64], index: 5, kind: input, shape index: {}]
  %s6 = inlined_call_operand.vmem [shape: f32[32,32], index: 6, kind: input, shape index: {}]
  %s7 = inlined_call_operand.vmem [shape: f32[1,32], index: 7, kind: input, shape index: {}]
  %s8 = inlined_call_operand.vmem [shape: f32[1,32], index: 8, kind: input, shape index: {}]
  %s9 = inlined_call_operand.vmem [shape: f32[1,32], index: 9, kind: input, shape index: {}]
  %s10 = inlined_call_operand.vmem [shape: f32[2,8,32], index: 10, kind: output, shape index: {}]
  %s11 = sld [smem:[#allocation0]]
  $region73: #{transformer_forward.11} parent=0
    _
  %s13 = ssub.s32 1, %s11
  %s14 = scalar_select 0, %s13, %s11
  loop: start=0, step=1, limit=4
  $region2: #{transformer_forward.11} parent=0 // loop_pre_header
    _
  $region3: #{transformer_forward.11} parent=0 // loop_header
    %s16 = sphi 0, %s20
    %p17 = scmp.ge.s32.totalorder %s16, 4
    %s26 = sphi 0, %s28
    %s29 = sphi 0, %s26
    %s30 = sphi 0, %s29
    %s46 = sphi 0, %s30
    %s52 = sphi 0, %s54
    %s55 = sphi 0, %s52
    %s56 = sphi 0, %s55
    %s72 = sphi 0, %s56
    %s76 = sphi 0, %s76
    %s78 = sphi 0, %s76
    %s79 = sphi 0, %s78
    %s93 = sphi 0, %s79
    %s97 = sphi 0, %s97
    %s99 = sphi 0, %s97
    %s100 = sphi 0, %s99
    %s114 = sphi 0, %s100
    %s118 = sphi 0, %s118
    %s120 = sphi 0, %s118
    %s121 = sphi 0, %s120
    %s135 = sphi 0, %s121
    %s139 = sphi 0, %s139
    %s141 = sphi 0, %s139
    %s142 = sphi 0, %s141
    %s156 = sphi 0, %s142
    %s160 = sphi 0, %s160
    %s162 = sphi 0, %s160
    %s163 = sphi 0, %s162
    %s177 = sphi 0, %s163
    %s181 = sphi 0, %s181
    %s183 = sphi 0, %s181
    %s184 = sphi 0, %s183
    %s198 = sphi 0, %s184
    %s202 = sphi 0, %s202
    %s204 = sphi 0, %s202
    %s205 = sphi 0, %s204
    %s219 = sphi 0, %s205
    %s223 = sphi 0, %s223
    %s225 = sphi 0, %s223
    %s226 = sphi 0, %s225
    %s240 = sphi 0, %s226
    %s246 = sphi 0, %s248
    %s249 = sphi 0, %s246
    %s250 = sphi 0, %s249
    %s266 = sphi 0, %s250
  $region4: #{transformer_forward.11} parent=0 // loop_header_branch
    %19 = sbr.rel (%p17) target = $region8
  $region5: #{transformer_forward.11} parent=0 // loop_body
    %s21 = ssub.s32 %s16, 1
    %s22 = ssub.s32 %s16, 2
    %s23 = sadd.s32 %s16, 1
    %s24 = ssub.s32 %s16, %s23
    %p25 = scmp.eq.s32.totalorder %s24, 0
    %s27 = sadd.s32 %s26, 1
    %s28 = scalar_select %p25, %s26, %s27
    %p31 = pneg %p25
    %p32 = scmp.eq.s32.totalorder %s16, 1
    %p33 = por %p31, %p32
    %p34 = scmp.ne.s32.totalorder %s26, %s29
    %p35 = scmp.eq.s32.totalorder %s16, 0
    %p36 = por %p34, %p35
    %p37 = scmp.ne.s32.totalorder %s26, %s29
    %p38 = scmp.eq.s32.totalorder %s21, 1
    %p39 = por %p37, %p38
    %p40 = scmp.ne.s32.totalorder %s29, %s30
    %p41 = scmp.eq.s32.totalorder %s21, 0
    %p42 = por %p40, %p41
    %p43 = scmp.ne.s32.totalorder %s29, %s30
    %p44 = scmp.eq.s32.totalorder %s22, 1
    %p45 = por %p43, %p44
    %p47 = scmp.ne.s32.totalorder %s30, %s46
    %p48 = scmp.eq.s32.totalorder %s22, 0
    %p49 = por %p47, %p48
    %s50 = ssub.s32 %s16, %s23
    %p51 = scmp.eq.s32.totalorder %s50, 0
    %s53 = sadd.s32 %s52, 1
    %s54 = scalar_select %p51, %s52, %s53
    %p57 = pneg %p51
    %p58 = scmp.eq.s32.totalorder %s16, 1
    %p59 = por %p57, %p58
    %p60 = scmp.ne.s32.totalorder %s52, %s55
    %p61 = scmp.eq.s32.totalorder %s16, 0
    %p62 = por %p60, %p61
    %p63 = scmp.ne.s32.totalorder %s52, %s55
    %p64 = scmp.eq.s32.totalorder %s21, 1
    %p65 = por %p63, %p64
    %p66 = scmp.ne.s32.totalorder %s55, %s56
    %p67 = scmp.eq.s32.totalorder %s21, 0
    %p68 = por %p66, %p67
    %p69 = scmp.ne.s32.totalorder %s55, %s56
    %p70 = scmp.eq.s32.totalorder %s22, 1
    %p71 = por %p69, %p70
    %p73 = scmp.ne.s32.totalorder %s56, %s72
    %p74 = scmp.eq.s32.totalorder %s22, 0
    %p75 = por %p73, %p74
    %s77 = sadd.s32 %s76, 1
    %p80 = scmp.eq.s32.totalorder %s16, 1
    %p81 = scmp.ne.s32.totalorder %s76, %s78
    %p82 = scmp.eq.s32.totalorder %s16, 0
    %p83 = por %p81, %p82
    %p84 = scmp.ne.s32.totalorder %s76, %s78
    %p85 = scmp.eq.s32.totalorder %s21, 1
    %p86 = por %p84, %p85
    %p87 = scmp.ne.s32.totalorder %s78, %s79
    %p88 = scmp.eq.s32.totalorder %s21, 0
    %p89 = por %p87, %p88
    %p90 = scmp.ne.s32.totalorder %s78, %s79
    %p91 = scmp.eq.s32.totalorder %s22, 1
    %p92 = por %p90, %p91
    %p94 = scmp.ne.s32.totalorder %s79, %s93
    %p95 = scmp.eq.s32.totalorder %s22, 0
    %p96 = por %p94, %p95
    %s98 = sadd.s32 %s97, 1
    %p101 = scmp.eq.s32.totalorder %s16, 1
    %p102 = scmp.ne.s32.totalorder %s97, %s99
    %p103 = scmp.eq.s32.totalorder %s16, 0
    %p104 = por %p102, %p103
    %p105 = scmp.ne.s32.totalorder %s97, %s99
    %p106 = scmp.eq.s32.totalorder %s21, 1
    %p107 = por %p105, %p106
    %p108 = scmp.ne.s32.totalorder %s99, %s100
    %p109 = scmp.eq.s32.totalorder %s21, 0
    %p110 = por %p108, %p109
    %p111 = scmp.ne.s32.totalorder %s99, %s100
    %p112 = scmp.eq.s32.totalorder %s22, 1
    %p113 = por %p111, %p112
    %p115 = scmp.ne.s32.totalorder %s100, %s114
    %p116 = scmp.eq.s32.totalorder %s22, 0
    %p117 = por %p115, %p116
    %s119 = sadd.s32 %s118, 1
    %p122 = scmp.eq.s32.totalorder %s16, 1
    %p123 = scmp.ne.s32.totalorder %s118, %s120
    %p124 = scmp.eq.s32.totalorder %s16, 0
    %p125 = por %p123, %p124
    %p126 = scmp.ne.s32.totalorder %s118, %s120
    %p127 = scmp.eq.s32.totalorder %s21, 1
    %p128 = por %p126, %p127
    %p129 = scmp.ne.s32.totalorder %s120, %s121
    %p130 = scmp.eq.s32.totalorder %s21, 0
    %p131 = por %p129, %p130
    %p132 = scmp.ne.s32.totalorder %s120, %s121
    %p133 = scmp.eq.s32.totalorder %s22, 1
    %p134 = por %p132, %p133
    %p136 = scmp.ne.s32.totalorder %s121, %s135
    %p137 = scmp.eq.s32.totalorder %s22, 0
    %p138 = por %p136, %p137
    %s140 = sadd.s32 %s139, 1
    %p143 = scmp.eq.s32.totalorder %s16, 1
    %p144 = scmp.ne.s32.totalorder %s139, %s141
    %p145 = scmp.eq.s32.totalorder %s16, 0
    %p146 = por %p144, %p145
    %p147 = scmp.ne.s32.totalorder %s139, %s141
    %p148 = scmp.eq.s32.totalorder %s21, 1
    %p149 = por %p147, %p148
    %p150 = scmp.ne.s32.totalorder %s141, %s142
    %p151 = scmp.eq.s32.totalorder %s21, 0
    %p152 = por %p150, %p151
    %p153 = scmp.ne.s32.totalorder %s141, %s142
    %p154 = scmp.eq.s32.totalorder %s22, 1
    %p155 = por %p153, %p154
    %p157 = scmp.ne.s32.totalorder %s142, %s156
    %p158 = scmp.eq.s32.totalorder %s22, 0
    %p159 = por %p157, %p158
    %s161 = sadd.s32 %s160, 1
    %p164 = scmp.eq.s32.totalorder %s16, 1
    %p165 = scmp.ne.s32.totalorder %s160, %s162
    %p166 = scmp.eq.s32.totalorder %s16, 0
    %p167 = por %p165, %p166
    %p168 = scmp.ne.s32.totalorder %s160, %s162
    %p169 = scmp.eq.s32.totalorder %s21, 1
    %p170 = por %p168, %p169
    %p171 = scmp.ne.s32.totalorder %s162, %s163
    %p172 = scmp.eq.s32.totalorder %s21, 0
    %p173 = por %p171, %p172
    %p174 = scmp.ne.s32.totalorder %s162, %s163
    %p175 = scmp.eq.s32.totalorder %s22, 1
    %p176 = por %p174, %p175
    %p178 = scmp.ne.s32.totalorder %s163, %s177
    %p179 = scmp.eq.s32.totalorder %s22, 0
    %p180 = por %p178, %p179
    %s182 = sadd.s32 %s181, 1
    %p185 = scmp.eq.s32.totalorder %s16, 1
    %p186 = scmp.ne.s32.totalorder %s181, %s183
    %p187 = scmp.eq.s32.totalorder %s16, 0
    %p188 = por %p186, %p187
    %p189 = scmp.ne.s32.totalorder %s181, %s183
    %p190 = scmp.eq.s32.totalorder %s21, 1
    %p191 = por %p189, %p190
    %p192 = scmp.ne.s32.totalorder %s183, %s184
    %p193 = scmp.eq.s32.totalorder %s21, 0
    %p194 = por %p192, %p193
    %p195 = scmp.ne.s32.totalorder %s183, %s184
    %p196 = scmp.eq.s32.totalorder %s22, 1
    %p197 = por %p195, %p196
    %p199 = scmp.ne.s32.totalorder %s184, %s198
    %p200 = scmp.eq.s32.totalorder %s22, 0
    %p201 = por %p199, %p200
    %s203 = sadd.s32 %s202, 1
    %p206 = scmp.eq.s32.totalorder %s16, 1
    %p207 = scmp.ne.s32.totalorder %s202, %s204
    %p208 = scmp.eq.s32.totalorder %s16, 0
    %p209 = por %p207, %p208
    %p210 = scmp.ne.s32.totalorder %s202, %s204
    %p211 = scmp.eq.s32.totalorder %s21, 1
    %p212 = por %p210, %p211
    %p213 = scmp.ne.s32.totalorder %s204, %s205
    %p214 = scmp.eq.s32.totalorder %s21, 0
    %p215 = por %p213, %p214
    %p216 = scmp.ne.s32.totalorder %s204, %s205
    %p217 = scmp.eq.s32.totalorder %s22, 1
    %p218 = por %p216, %p217
    %p220 = scmp.ne.s32.totalorder %s205, %s219
    %p221 = scmp.eq.s32.totalorder %s22, 0
    %p222 = por %p220, %p221
    %s224 = sadd.s32 %s223, 1
    %p227 = scmp.eq.s32.totalorder %s16, 1
    %p228 = scmp.ne.s32.totalorder %s223, %s225
    %p229 = scmp.eq.s32.totalorder %s16, 0
    %p230 = por %p228, %p229
    %p231 = scmp.ne.s32.totalorder %s223, %s225
    %p232 = scmp.eq.s32.totalorder %s21, 1
    %p233 = por %p231, %p232
    %p234 = scmp.ne.s32.totalorder %s225, %s226
    %p235 = scmp.eq.s32.totalorder %s21, 0
    %p236 = por %p234, %p235
    %p237 = scmp.ne.s32.totalorder %s225, %s226
    %p238 = scmp.eq.s32.totalorder %s22, 1
    %p239 = por %p237, %p238
    %p241 = scmp.ne.s32.totalorder %s226, %s240
    %p242 = scmp.eq.s32.totalorder %s22, 0
    %p243 = por %p241, %p242
    %s244 = ssub.s32 %s16, %s23
    %p245 = scmp.eq.s32.totalorder %s244, 0
    %s247 = sadd.s32 %s246, 1
    %s248 = scalar_select %p245, %s246, %s247
    %p251 = pneg %p245
    %p252 = scmp.eq.s32.totalorder %s16, 1
    %p253 = por %p251, %p252
    %p254 = scmp.ne.s32.totalorder %s246, %s249
    %p255 = scmp.eq.s32.totalorder %s16, 0
    %p256 = por %p254, %p255
    %p257 = scmp.ne.s32.totalorder %s246, %s249
    %p258 = scmp.eq.s32.totalorder %s21, 1
    %p259 = por %p257, %p258
    %p260 = scmp.ne.s32.totalorder %s249, %s250
    %p261 = scmp.eq.s32.totalorder %s21, 0
    %p262 = por %p260, %p261
    %p263 = scmp.ne.s32.totalorder %s249, %s250
    %p264 = scmp.eq.s32.totalorder %s22, 1
    %p265 = por %p263, %p264
    %p267 = scmp.ne.s32.totalorder %s250, %s266
    %p268 = scmp.eq.s32.totalorder %s22, 0
    %p269 = por %p267, %p268
    %p270 = scmp.le.s32.totalorder 1, %s16
    %p271 = scmp.lt.s32.totalorder %s16, 3
    %p272 = pnand %p270, %p271
    %p273 = pneg %p272
    // Predicated region
    $region9: #{transformer_forward.11} parent=5 // pred_check
      _
    $region10: #{transformer_forward.11} parent=5 // pred_check_branch
      %275 = sbr.rel (%p272) target = $region12
    $region11: #{transformer_forward.11} parent=5 // pred_region
      %s276 = ssub.s32 %s16, 1
      // Predicated region
      $region13: #{transformer_forward.11} parent=11 // pred_check
        %p277 = pneg %p89
      $region14: #{transformer_forward.11} parent=11 // pred_check_branch
        %279 = sbr.rel (%p277) target = $region16
      $region15: #{transformer_forward.11} parent=11 // pred_region
        _
      $region16: #{transformer_forward.11} parent=11 // pred_fallthru
        _
      // Predicated region
      $region17: #{transformer_forward.11} parent=11 // pred_check
        %p280 = pneg %p110
      $region18: #{transformer_forward.11} parent=11 // pred_check_branch
        %282 = sbr.rel (%p280) target = $region20
      $region19: #{transformer_forward.11} parent=11 // pred_region
        _
      $region20: #{transformer_forward.11} parent=11 // pred_fallthru
        _
      // Predicated region
      $region21: #{transformer_forward.11} parent=11 // pred_check
        %p283 = pneg %p131
      $region22: #{transformer_forward.11} parent=11 // pred_check_branch
        %285 = sbr.rel (%p283) target = $region24
      $region23: #{transformer_forward.11} parent=11 // pred_region
        _
      $region24: #{transformer_forward.11} parent=11 // pred_fallthru
        _
      // Predicated region
      $region25: #{transformer_forward.11} parent=11 // pred_check
        %p286 = pneg %p152
      $region26: #{transformer_forward.11} parent=11 // pred_check_branch
        %288 = sbr.rel (%p286) target = $region28
      $region27: #{transformer_forward.11} parent=11 // pred_region
        _
      $region28: #{transformer_forward.11} parent=11 // pred_fallthru
        _
      // Predicated region
      $region29: #{transformer_forward.11} parent=11 // pred_check
        %p289 = pneg %p173
      $region30: #{transformer_forward.11} parent=11 // pred_check_branch
        %291 = sbr.rel (%p289) target = $region32
      $region31: #{transformer_forward.11} parent=11 // pred_region
        _
      $region32: #{transformer_forward.11} parent=11 // pred_fallthru
        _
      // Predicated region
      $region33: #{transformer_forward.11} parent=11 // pred_check
        %p292 = pneg %p194
      $region34: #{transformer_forward.11} parent=11 // pred_check_branch
        %294 = sbr.rel (%p292) target = $region36
      $region35: #{transformer_forward.11} parent=11 // pred_region
        _
      $region36: #{transformer_forward.11} parent=11 // pred_fallthru
        _
      // Predicated region
      $region37: #{transformer_forward.11} parent=11 // pred_check
        %p295 = pneg %p215
      $region38: #{transformer_forward.11} parent=11 // pred_check_branch
        %297 = sbr.rel (%p295) target = $region40
      $region39: #{transformer_forward.11} parent=11 // pred_region
        _
      $region40: #{transformer_forward.11} parent=11 // pred_fallthru
        _
      // Predicated region
      $region41: #{transformer_forward.11} parent=11 // pred_check
        %p298 = pneg %p236
      $region42: #{transformer_forward.11} parent=11 // pred_check_branch
        %300 = sbr.rel (%p298) target = $region44
      $region43: #{transformer_forward.11} parent=11 // pred_region
        _
      $region44: #{transformer_forward.11} parent=11 // pred_fallthru
        _
    $region12: #{transformer_forward.11} parent=5 // pred_fallthru
      _
    %p301 = scmp.lt.s32.totalorder %s16, 2
    // Predicated region
    $region45: #{transformer_forward.11} parent=5 // pred_check
      %p302 = pneg %p301
    $region46: #{transformer_forward.11} parent=5 // pred_check_branch
      %304 = sbr.rel (%p302) target = $region48
    $region47: #{transformer_forward.11} parent=5 // pred_region
      // Predicated region
      $region49: #{transformer_forward.11} parent=47 // pred_check
        %p305 = pneg %p36
      $region50: #{transformer_forward.11} parent=47 // pred_check_branch
        %307 = sbr.rel (%p305) target = $region52
      $region51: #{transformer_forward.11} parent=47 // pred_region
        %p308 = scmp.lt.s32.totalorder %s16, 1
        %s309 = scalar_select %p308, %s16, 1
        %s310 = smul.addr %s309, 8
        %s311 = scalar_lea.vmem %s0, %s310
      $region52: #{transformer_forward.11} parent=47 // pred_fallthru
        _
      // Predicated region
      $region53: #{transformer_forward.11} parent=47 // pred_check
        %p312 = pneg %p62
      $region54: #{transformer_forward.11} parent=47 // pred_check_branch
        %314 = sbr.rel (%p312) target = $region56
      $region55: #{transformer_forward.11} parent=47 // pred_region
        %p315 = scmp.lt.s32.totalorder %s16, 1
        %s316 = scalar_select %p315, %s16, 1
        %s317 = smul.addr %s316, 8
        %s318 = scalar_lea.vmem %s1, %s317
      $region56: #{transformer_forward.11} parent=47 // pred_fallthru
        _
    $region48: #{transformer_forward.11} parent=5 // pred_fallthru
      _
    %p319 = scmp.le.s32.totalorder 1, %s16
    %p320 = scmp.lt.s32.totalorder %s16, 3
    %p321 = pnand %p319, %p320
    %p322 = pneg %p321
    // Predicated region
    $region57: #{transformer_forward.11} parent=5 // pred_check
      _
    $region58: #{transformer_forward.11} parent=5 // pred_check_branch
      %324 = sbr.rel (%p321) target = $region60
    $region59: #{transformer_forward.11} parent=5 // pred_region
      %s325 = ssub.s32 %s16, 1
      %p326 = scmp.lt.s32.totalorder %s21, 1
      %s327 = scalar_select %p326, %s21, 1
      %s328 = smul.addr %s327, 8
      %s329 = scalar_lea.vmem %s0, %s328
      %p330 = pneg %p42
      %p331 = pneg %p39
      %p332 = scmp.lt.s32.totalorder %s21, 1
      %s333 = scalar_select %p332, %s21, 1
      %s334 = smul.addr %s333, 8
      %s335 = scalar_lea.vmem %s1, %s334
      %p336 = pneg %p68
      %p337 = pneg %p65
      %p338 = pneg %p89
      %p339 = pneg %p86
      %p340 = pneg %p110
      %p341 = pneg %p107
      %p342 = pneg %p131
      %p343 = pneg %p128
      %p344 = pneg %p152
      %p345 = pneg %p149
      %p346 = pneg %p173
      %p347 = pneg %p170
      %p348 = pneg %p194
      %p349 = pneg %p191
      %p350 = pneg %p215
      %p351 = pneg %p212
      %p352 = pneg %p236
      %p353 = pneg %p233
      %p354 = pneg %p262
      %p355 = pneg %p259
      %p356 = scmp.lt.s32.totalorder %s21, 1
      %s357 = scalar_select %p356, %s21, 1
      %s358 = smul.addr %s357, 8
      %s359 = scalar_lea.vmem %s10, %s358
      %p360 = scmp.lt.s32.totalorder %s21, 1
      %s361 = scalar_select %p360, %s21, 1
      %s362 = smul.addr %s361, 8
      %s363 = scalar_lea.vmem %s0, %s362
      %p364 = scmp.lt.s32.totalorder %s21, 1
      %s365 = scalar_select %p364, %s21, 1
      %s366 = smul.addr %s365, 8
      %s367 = scalar_lea.vmem %s1, %s366
      %p368 = scmp.lt.s32.totalorder %s21, 1
      %s369 = scalar_select %p368, %s21, 1
      %s370 = smul.addr %s369, 8
      %s371 = scalar_lea.vmem %s10, %s370
      %v372 = vld [vmem:[%s363] sm:$0xff]
      %v373 = vld [vmem:[%s367] sm:$0xff]
      %v374 = vld [vmem:[%s2] sm:$0xff]
      %v375 = vld [vmem:[%s2 + $0x8] sm:$0xff]
      %v376 = vld [vmem:[%s2 + $0x10] sm:$0xff]
      %v377 = vld [vmem:[%s2 + $0x18] sm:$0xff]
      %v378 = vld [vmem:[%s3] sm:$0x1]
      %v380 = vlaneseq
      %v381 = vshrl.u32 %v380, 7
      %v382 = vsub.s32 0, %v381
      %v383 = vrot.slane %v378, %v382
      %vm385 = vcmask 261120
      %v387 = vsel %vm385, %v372, 0
      %389 = vmatprep.subr.mxu0 0.0
      %390 = vmatpush1.msra.mxu0 %v374
      %391 = vmatprep.subr.mxu0 0.0
      %392 = vmatpush1.msra.mxu0 %v375
      %393 = vmatprep.subr.mxu0 0.0
      %394 = vmatpush1.msra.mxu0 %v376
      %395 = vmatprep.subr.mxu0 0.0
      %396 = vmatpush1.msra.mxu0 %v377
      %397 = vmatprep.subr.mxu0 0.0
      %398 = vmatpush1.msra.mxu0 0.0
      %399 = vmatprep.subr.mxu0 0.0
      %400 = vmatpush1.msra.mxu0 0.0
      %401 = vmatprep.subr.mxu0 0.0
      %402 = vmatpush1.msra.mxu0 0.0
      %403 = vmatprep.subr.mxu0 0.0
      %404 = vmatpush1.msra.mxu0 0.0
      %405 = vmatprep.subr.mxu0 0.0
      %406 = vmatpush1.msra.mxu0 0.0
      %407 = vmatprep.subr.mxu0 0.0
      %408 = vmatpush1.msra.mxu0 0.0
      %409 = vmatprep.subr.mxu0 0.0
      %410 = vmatpush1.msra.mxu0 0.0
      %411 = vmatprep.subr.mxu0 0.0
      %412 = vmatpush1.msra.mxu0 0.0
      %413 = vmatprep.subr.mxu0 0.0
      %414 = vmatpush1.msra.mxu0 0.0
      %415 = vmatprep.subr.mxu0 0.0
      %416 = vmatpush1.msra.mxu0 0.0
      %417 = vmatprep.subr.mxu0 0.0
      %418 = vmatpush1.msra.mxu0 0.0
      %419 = vmatprep.subr.mxu0 0.0
      %420 = vmatpush1.msra.mxu0 0.0
      %421 = vmatprep.subr.mxu0 0.0
      %422 = vmatpush1.msra.mxu0 0.0
      %423 = vmatprep.subr.mxu0 0.0
      %424 = vmatpush1.msra.mxu0 0.0
      %425 = vmatprep.subr.mxu0 0.0
      %426 = vmatpush1.msra.mxu0 0.0
      %427 = vmatprep.subr.mxu0 0.0
      %428 = vmatpush1.msra.mxu0 0.0
      %429 = vmatprep.subr.mxu0 0.0
      %430 = vmatpush1.msra.mxu0 0.0
      %431 = vmatprep.subr.mxu0 0.0
      %432 = vmatpush1.msra.mxu0 0.0
      %433 = vmatprep.subr.mxu0 0.0
      %434 = vmatpush1.msra.mxu0 0.0
      %435 = vmatprep.subr.mxu0 0.0
      %436 = vmatpush1.msra.mxu0 0.0
      %437 = vmatprep.subr.mxu0 0.0
      %438 = vmatpush1.msra.mxu0 0.0
      %439 = vmatprep.subr.mxu0 0.0
      %440 = vmatpush1.msra.mxu0 0.0
      %441 = vmatprep.subr.mxu0 0.0
      %442 = vmatpush1.msra.mxu0 0.0
      %443 = vmatprep.subr.mxu0 0.0
      %444 = vmatpush1.msra.mxu0 0.0
      %445 = vmatprep.subr.mxu0 0.0
      %446 = vmatpush1.msra.mxu0 0.0
      %447 = vmatprep.subr.mxu0 0.0
      %448 = vmatpush1.msra.mxu0 0.0
      %449 = vmatprep.subr.mxu0 0.0
      %450 = vmatpush1.msra.mxu0 0.0
      %451 = vmatprep.subr.mxu0 0.0
      %452 = vmatpush1.msra.mxu0 0.0
      %453 = vmatprep.mubr.f32.mxu0 0.0
      %454 = vmatmul.mubr.f32.gmra.mrb[0].mxu0 %v387
      %v455 = vpop.f32.mrb[0].mxu0
      %v456 = vadd.f32 %v383, %v455
      %v457 = vpop.f32.mrb[0].mxu0
      %458 = vdwg.mxu0
      %v459 = vld [vmem:[%s4] sm:$0xff]
      %v460 = vld [vmem:[%s4 + $0x8] sm:$0xff]
      %v461 = vld [vmem:[%s4 + $0x10] sm:$0xff]
      %v462 = vld [vmem:[%s4 + $0x18] sm:$0xff]
      %v463 = vld [vmem:[%s5] sm:$0x1]
      %v465 = vlaneseq
      %v466 = vshrl.u32 %v465, 7
      %v467 = vsub.s32 0, %v466
      %v468 = vrot.slane %v463, %v467
      %v471 = vsel %vm385, %v373, 0
      %473 = vmatprep.subr.mxu0 0.0
      %474 = vmatpush1.msra.mxu0 %v459
      %475 = vmatprep.subr.mxu0 0.0
      %476 = vmatpush1.msra.mxu0 %v460
      %477 = vmatprep.subr.mxu0 0.0
      %478 = vmatpush1.msra.mxu0 %v461
      %479 = vmatprep.subr.mxu0 0.0
      %480 = vmatpush1.msra.mxu0 %v462
      %481 = vmatprep.subr.mxu0 0.0
      %482 = vmatpush1.msra.mxu0 0.0
      %483 = vmatprep.subr.mxu0 0.0
      %484 = vmatpush1.msra.mxu0 0.0
      %485 = vmatprep.subr.mxu0 0.0
      %486 = vmatpush1.msra.mxu0 0.0
      %487 = vmatprep.subr.mxu0 0.0
      %488 = vmatpush1.msra.mxu0 0.0
      %489 = vmatprep.subr.mxu0 0.0
      %490 = vmatpush1.msra.mxu0 0.0
      %491 = vmatprep.subr.mxu0 0.0
      %492 = vmatpush1.msra.mxu0 0.0
      %493 = vmatprep.subr.mxu0 0.0
      %494 = vmatpush1.msra.mxu0 0.0
      %495 = vmatprep.subr.mxu0 0.0
      %496 = vmatpush1.msra.mxu0 0.0
      %497 = vmatprep.subr.mxu0 0.0
      %498 = vmatpush1.msra.mxu0 0.0
      %499 = vmatprep.subr.mxu0 0.0
      %500 = vmatpush1.msra.mxu0 0.0
      %501 = vmatprep.subr.mxu0 0.0
      %502 = vmatpush1.msra.mxu0 0.0
      %503 = vmatprep.subr.mxu0 0.0
      %504 = vmatpush1.msra.mxu0 0.0
      %505 = vmatprep.subr.mxu0 0.0
      %506 = vmatpush1.msra.mxu0 0.0
      %507 = vmatprep.subr.mxu0 0.0
      %508 = vmatpush1.msra.mxu0 0.0
      %509 = vmatprep.subr.mxu0 0.0
      %510 = vmatpush1.msra.mxu0 0.0
      %511 = vmatprep.subr.mxu0 0.0
      %512 = vmatpush1.msra.mxu0 0.0
      %513 = vmatprep.subr.mxu0 0.0
      %514 = vmatpush1.msra.mxu0 0.0
      %515 = vmatprep.subr.mxu0 0.0
      %516 = vmatpush1.msra.mxu0 0.0
      %517 = vmatprep.subr.mxu0 0.0
      %518 = vmatpush1.msra.mxu0 0.0
      %519 = vmatprep.subr.mxu0 0.0
      %520 = vmatpush1.msra.mxu0 0.0
      %521 = vmatprep.subr.mxu0 0.0
      %522 = vmatpush1.msra.mxu0 0.0
      %523 = vmatprep.subr.mxu0 0.0
      %524 = vmatpush1.msra.mxu0 0.0
      %525 = vmatprep.subr.mxu0 0.0
      %526 = vmatpush1.msra.mxu0 0.0
      %527 = vmatprep.subr.mxu0 0.0
      %528 = vmatpush1.msra.mxu0 0.0
      %529 = vmatprep.subr.mxu0 0.0
      %530 = vmatpush1.msra.mxu0 0.0
      %531 = vmatprep.subr.mxu0 0.0
      %532 = vmatpush1.msra.mxu0 0.0
      %533 = vmatprep.subr.mxu0 0.0
      %534 = vmatpush1.msra.mxu0 0.0
      %535 = vmatprep.subr.mxu0 0.0
      %536 = vmatpush1.msra.mxu0 0.0
      %537 = vmatprep.mubr.f32.mxu0 0.0
      %538 = vmatmul.mubr.f32.gmra.mrb[0].mxu0 %v471
      %v539 = vpop.f32.mrb[0].mxu0
      %v540 = vadd.f32 %v468, %v539
      %v541 = vpop.f32.mrb[0].mxu0
      %542 = vdwg.mxu0
      %vm543 = vcmask 64512
      %v545 = vsel %vm543, %v456, 0
      %v548 = vsel %vm543, %v540, 0
      %550 = vmatprep.subr.mxu0 0.0
      %551 = vmatpush1.xpose.msra.mxu0 %v548
      %552 = vmatprep.subr.mxu0 0.0
      %553 = vmatpush1.xpose.msra.mxu0 0.0
      %554 = vmatprep.subr.mxu0 0.0
      %555 = vmatpush1.xpose.msra.mxu0 0.0
      %556 = vmatprep.subr.mxu0 0.0
      %557 = vmatpush1.xpose.msra.mxu0 0.0
      %558 = vmatprep.subr.mxu0 0.0
      %559 = vmatpush1.xpose.msra.mxu0 0.0
      %560 = vmatprep.subr.mxu0 0.0
      %561 = vmatpush1.xpose.msra.mxu0 0.0
      %562 = vmatprep.subr.mxu0 0.0
      %563 = vmatpush1.xpose.msra.mxu0 0.0
      %564 = vmatprep.subr.mxu0 0.0
      %565 = vmatpush1.xpose.msra.mxu0 0.0
      %566 = vmatprep.subr.mxu0 0.0
      %567 = vmatpush1.xpose.msra.mxu0 0.0
      %568 = vmatprep.subr.mxu0 0.0
      %569 = vmatpush1.xpose.msra.mxu0 0.0
      %570 = vmatprep.subr.mxu0 0.0
      %571 = vmatpush1.xpose.msra.mxu0 0.0
      %572 = vmatprep.subr.mxu0 0.0
      %573 = vmatpush1.xpose.msra.mxu0 0.0
      %574 = vmatprep.subr.mxu0 0.0
      %575 = vmatpush1.xpose.msra.mxu0 0.0
      %576 = vmatprep.subr.mxu0 0.0
      %577 = vmatpush1.xpose.msra.mxu0 0.0
      %578 = vmatprep.subr.mxu0 0.0
      %579 = vmatpush1.xpose.msra.mxu0 0.0
      %580 = vmatprep.subr.mxu0 0.0
      %581 = vmatpush1.xpose.msra.mxu0 0.0
      %582 = vmatprep.subr.mxu0 0.0
      %583 = vmatpush1.xpose.msra.mxu0 0.0
      %584 = vmatprep.subr.mxu0 0.0
      %585 = vmatpush1.xpose.msra.mxu0 0.0
      %586 = vmatprep.subr.mxu0 0.0
      %587 = vmatpush1.xpose.msra.mxu0 0.0
      %588 = vmatprep.subr.mxu0 0.0
      %589 = vmatpush1.xpose.msra.mxu0 0.0
      %590 = vmatprep.subr.mxu0 0.0
      %591 = vmatpush1.xpose.msra.mxu0 0.0
      %592 = vmatprep.subr.mxu0 0.0
      %593 = vmatpush1.xpose.msra.mxu0 0.0
      %594 = vmatprep.subr.mxu0 0.0
      %595 = vmatpush1.xpose.msra.mxu0 0.0
      %596 = vmatprep.subr.mxu0 0.0
      %597 = vmatpush1.xpose.msra.mxu0 0.0
      %598 = vmatprep.subr.mxu0 0.0
      %599 = vmatpush1.xpose.msra.mxu0 0.0
      %600 = vmatprep.subr.mxu0 0.0
      %601 = vmatpush1.xpose.msra.mxu0 0.0
      %602 = vmatprep.subr.mxu0 0.0
      %603 = vmatpush1.xpose.msra.mxu0 0.0
      %604 = vmatprep.subr.mxu0 0.0
      %605 = vmatpush1.xpose.msra.mxu0 0.0
      %606 = vmatprep.subr.mxu0 0.0
      %607 = vmatpush1.xpose.msra.mxu0 0.0
      %608 = vmatprep.subr.mxu0 0.0
      %609 = vmatpush1.xpose.msra.mxu0 0.0
      %610 = vmatprep.subr.mxu0 0.0
      %611 = vmatpush1.xpose.msra.mxu0 0.0
      %612 = vmatprep.subr.mxu0 0.0
      %613 = vmatpush1.xpose.msra.mxu0 0.0
      %614 = vmatprep.mubr.f32.mxu0 0.0
      %615 = vmatmul.mubr.f32.gmra.mrb[0].mxu0 %v545
      %v616 = vpop.f32.mrb[0].mxu0
      %v617 = vadd.f32 0.0, %v616
      %v618 = vpop.f32.mrb[0].mxu0
      %619 = vdwg.mxu0
      %v620 = vsel %vm543, %v617, -inf
      %621 = vmax.xlane.f32.xlu0 %v620
      %v622 = vpop.xlane.xlu0 %621
      %v623 = vsub.f32 %v617, %v622
      %v624 = vmul.f32 %v623, 1.442695
      %v625 = vpow.pop %v624
      %v626 = vsel %vm543, %v625, 0.0
      %627 = vadd.xlane.f32.xlu0 %v626
      %v628 = vpop.xlane.xlu0 %627
      %v629 = vrcp.pop %v628
      %v630 = vmul.f32 %v625, %v629
      %631 = vrot.lane.b32.xlu0 %v540, 96
      %v632 = vpop.permute.xlu0 %631
      %v635 = vsel %vm543, %v630, 0
      %637 = vmatprep.subr.mxu0 0.0
      %638 = vmatpush1.msra.mxu0 %v632
      %639 = vmatprep.subr.mxu0 0.0
      %640 = vmatpush1.msra.mxu0 0.0
      %641 = vmatprep.subr.mxu0 0.0
      %642 = vmatpush1.msra.mxu0 0.0
      %643 = vmatprep.subr.mxu0 0.0
      %644 = vmatpush1.msra.mxu0 0.0
      %645 = vmatprep.subr.mxu0 0.0
      %646 = vmatpush1.msra.mxu0 0.0
      %647 = vmatprep.subr.mxu0 0.0
      %648 = vmatpush1.msra.mxu0 0.0
      %649 = vmatprep.subr.mxu0 0.0
      %650 = vmatpush1.msra.mxu0 0.0
      %651 = vmatprep.subr.mxu0 0.0
      %652 = vmatpush1.msra.mxu0 0.0
      %653 = vmatprep.subr.mxu0 0.0
      %654 = vmatpush1.msra.mxu0 0.0
      %655 = vmatprep.subr.mxu0 0.0
      %656 = vmatpush1.msra.mxu0 0.0
      %657 = vmatprep.subr.mxu0 0.0
      %658 = vmatpush1.msra.mxu0 0.0
      %659 = vmatprep.subr.mxu0 0.0
      %660 = vmatpush1.msra.mxu0 0.0
      %661 = vmatprep.subr.mxu0 0.0
      %662 = vmatpush1.msra.mxu0 0.0
      %663 = vmatprep.subr.mxu0 0.0
      %664 = vmatpush1.msra.mxu0 0.0
      %665 = vmatprep.subr.mxu0 0.0
      %666 = vmatpush1.msra.mxu0 0.0
      %667 = vmatprep.subr.mxu0 0.0
      %668 = vmatpush1.msra.mxu0 0.0
      %669 = vmatprep.subr.mxu0 0.0
      %670 = vmatpush1.msra.mxu0 0.0
      %671 = vmatprep.subr.mxu0 0.0
      %672 = vmatpush1.msra.mxu0 0.0
      %673 = vmatprep.subr.mxu0 0.0
      %674 = vmatpush1.msra.mxu0 0.0
      %675 = vmatprep.subr.mxu0 0.0
      %676 = vmatpush1.msra.mxu0 0.0
      %677 = vmatprep.subr.mxu0 0.0
      %678 = vmatpush1.msra.mxu0 0.0
      %679 = vmatprep.subr.mxu0 0.0
      %680 = vmatpush1.msra.mxu0 0.0
      %681 = vmatprep.subr.mxu0 0.0
      %682 = vmatpush1.msra.mxu0 0.0
      %683 = vmatprep.subr.mxu0 0.0
      %684 = vmatpush1.msra.mxu0 0.0
      %685 = vmatprep.subr.mxu0 0.0
      %686 = vmatpush1.msra.mxu0 0.0
      %687 = vmatprep.subr.mxu0 0.0
      %688 = vmatpush1.msra.mxu0 0.0
      %689 = vmatprep.subr.mxu0 0.0
      %690 = vmatpush1.msra.mxu0 0.0
      %691 = vmatprep.subr.mxu0 0.0
      %692 = vmatpush1.msra.mxu0 0.0
      %693 = vmatprep.subr.mxu0 0.0
      %694 = vmatpush1.msra.mxu0 0.0
      %695 = vmatprep.subr.mxu0 0.0
      %696 = vmatpush1.msra.mxu0 0.0
      %697 = vmatprep.subr.mxu0 0.0
      %698 = vmatpush1.msra.mxu0 0.0
      %699 = vmatprep.subr.mxu0 0.0
      %700 = vmatpush1.msra.mxu0 0.0
      %701 = vmatprep.mubr.f32.mxu0 0.0
      %702 = vmatmul.mubr.f32.gmra.mrb[0].mxu0 %v635
      %v703 = vpop.f32.mrb[0].mxu0
      %v704 = vadd.f32 0.0, %v703
      %v705 = vpop.f32.mrb[0].mxu0
      %706 = vdwg.mxu0
      %v707 = vld [vmem:[%s6] sm:$0xff]
      %708 = vrot.lane.b32.xlu0 %v456, 120
      %v709 = vpop.permute.xlu0 %708
      %710 = vrot.lane.b32.xlu0 %v540, 120
      %v711 = vpop.permute.xlu0 %710
      %v712 = vsel %vm543, %v709, 0
      %v714 = vsel %vm543, %v711, 0
      %716 = vmatprep.subr.mxu0 0.0
      %717 = vmatpush1.xpose.msra.mxu0 %v714
      %718 = vmatprep.subr.mxu0 0.0
      %719 = vmatpush1.xpose.msra.mxu0 0.0
      %720 = vmatprep.subr.mxu0 0.0
      %721 = vmatpush1.xpose.msra.mxu0 0.0
      %722 = vmatprep.subr.mxu0 0.0
      %723 = vmatpush1.xpose.msra.mxu0 0.0
      %724 = vmatprep.subr.mxu0 0.0
      %725 = vmatpush1.xpose.msra.mxu0 0.0
      %726 = vmatprep.subr.mxu0 0.0
      %727 = vmatpush1.xpose.msra.mxu0 0.0
      %728 = vmatprep.subr.mxu0 0.0
      %729 = vmatpush1.xpose.msra.mxu0 0.0
      %730 = vmatprep.subr.mxu0 0.0
      %731 = vmatpush1.xpose.msra.mxu0 0.0
      %732 = vmatprep.subr.mxu0 0.0
      %733 = vmatpush1.xpose.msra.mxu0 0.0
      %734 = vmatprep.subr.mxu0 0.0
      %735 = vmatpush1.xpose.msra.mxu0 0.0
      %736 = vmatprep.subr.mxu0 0.0
      %737 = vmatpush1.xpose.msra.mxu0 0.0
      %738 = vmatprep.subr.mxu0 0.0
      %739 = vmatpush1.xpose.msra.mxu0 0.0
      %740 = vmatprep.subr.mxu0 0.0
      %741 = vmatpush1.xpose.msra.mxu0 0.0
      %742 = vmatprep.subr.mxu0 0.0
      %743 = vmatpush1.xpose.msra.mxu0 0.0
      %744 = vmatprep.subr.mxu0 0.0
      %745 = vmatpush1.xpose.msra.mxu0 0.0
      %746 = vmatprep.subr.mxu0 0.0
      %747 = vmatpush1.xpose.msra.mxu0 0.0
      %748 = vmatprep.subr.mxu0 0.0
      %749 = vmatpush1.xpose.msra.mxu0 0.0
      %750 = vmatprep.subr.mxu0 0.0
      %751 = vmatpush1.xpose.msra.mxu0 0.0
      %752 = vmatprep.subr.mxu0 0.0
      %753 = vmatpush1.xpose.msra.mxu0 0.0
      %754 = vmatprep.subr.mxu0 0.0
      %755 = vmatpush1.xpose.msra.mxu0 0.0
      %756 = vmatprep.subr.mxu0 0.0
      %757 = vmatpush1.xpose.msra.mxu0 0.0
      %758 = vmatprep.subr.mxu0 0.0
      %759 = vmatpush1.xpose.msra.mxu0 0.0
      %760 = vmatprep.subr.mxu0 0.0
      %761 = vmatpush1.xpose.msra.mxu0 0.0
      %762 = vmatprep.subr.mxu0 0.0
      %763 = vmatpush1.xpose.msra.mxu0 0.0
      %764 = vmatprep.subr.mxu0 0.0
      %765 = vmatpush1.xpose.msra.mxu0 0.0
      %766 = vmatprep.subr.mxu0 0.0
      %767 = vmatpush1.xpose.msra.mxu0 0.0
      %768 = vmatprep.subr.mxu0 0.0
      %769 = vmatpush1.xpose.msra.mxu0 0.0
      %770 = vmatprep.subr.mxu0 0.0
      %771 = vmatpush1.xpose.msra.mxu0 0.0
      %772 = vmatprep.subr.mxu0 0.0
      %773 = vmatpush1.xpose.msra.mxu0 0.0
      %774 = vmatprep.subr.mxu0 0.0
      %775 = vmatpush1.xpose.msra.mxu0 0.0
      %776 = vmatprep.subr.mxu0 0.0
      %777 = vmatpush1.xpose.msra.mxu0 0.0
      %778 = vmatprep.subr.mxu0 0.0
      %779 = vmatpush1.xpose.msra.mxu0 0.0
      %780 = vmatprep.mubr.f32.mxu0 0.0
      %781 = vmatmul.mubr.f32.gmra.mrb[0].mxu0 %v712
      %v782 = vpop.f32.mrb[0].mxu0
      %v783 = vadd.f32 0.0, %v782
      %v784 = vpop.f32.mrb[0].mxu0
      %785 = vdwg.mxu0
      %v786 = vsel %vm543, %v783, -inf
      %787 = vmax.xlane.f32.xlu0 %v786
      %v788 = vpop.xlane.xlu0 %787
      %v789 = vsub.f32 %v783, %v788
      %v790 = vmul.f32 %v789, 1.442695
      %v791 = vpow.pop %v790
      %v792 = vsel %vm543, %v791, 0.0
      %793 = vadd.xlane.f32.xlu0 %v792
      %v794 = vpop.xlane.xlu0 %793
      %v795 = vrcp.pop %v794
      %v796 = vmul.f32 %v791, %v795
      %797 = vrot.lane.b32.xlu0 %v540, 88
      %v798 = vpop.permute.xlu0 %797
      %v801 = vsel %vm543, %v796, 0
      %803 = vmatprep.subr.mxu0 0.0
      %804 = vmatpush1.msra.mxu0 %v798
      %805 = vmatprep.subr.mxu0 0.0
      %806 = vmatpush1.msra.mxu0 0.0
      %807 = vmatprep.subr.mxu0 0.0
      %808 = vmatpush1.msra.mxu0 0.0
      %809 = vmatprep.subr.mxu0 0.0
      %810 = vmatpush1.msra.mxu0 0.0
      %811 = vmatprep.subr.mxu0 0.0
      %812 = vmatpush1.msra.mxu0 0.0
      %813 = vmatprep.subr.mxu0 0.0
      %814 = vmatpush1.msra.mxu0 0.0
      %815 = vmatprep.subr.mxu0 0.0
      %816 = vmatpush1.msra.mxu0 0.0
      %817 = vmatprep.subr.mxu0 0.0
      %818 = vmatpush1.msra.mxu0 0.0
      %819 = vmatprep.subr.mxu0 0.0
      %820 = vmatpush1.msra.mxu0 0.0
      %821 = vmatprep.subr.mxu0 0.0
      %822 = vmatpush1.msra.mxu0 0.0
      %823 = vmatprep.subr.mxu0 0.0
      %824 = vmatpush1.msra.mxu0 0.0
      %825 = vmatprep.subr.mxu0 0.0
      %826 = vmatpush1.msra.mxu0 0.0
      %827 = vmatprep.subr.mxu0 0.0
      %828 = vmatpush1.msra.mxu0 0.0
      %829 = vmatprep.subr.mxu0 0.0
      %830 = vmatpush1.msra.mxu0 0.0
      %831 = vmatprep.subr.mxu0 0.0
      %832 = vmatpush1.msra.mxu0 0.0
      %833 = vmatprep.subr.mxu0 0.0
      %834 = vmatpush1.msra.mxu0 0.0
      %835 = vmatprep.subr.mxu0 0.0
      %836 = vmatpush1.msra.mxu0 0.0
      %837 = vmatprep.subr.mxu0 0.0
      %838 = vmatpush1.msra.mxu0 0.0
      %839 = vmatprep.subr.mxu0 0.0
      %840 = vmatpush1.msra.mxu0 0.0
      %841 = vmatprep.subr.mxu0 0.0
      %842 = vmatpush1.msra.mxu0 0.0
      %843 = vmatprep.subr.mxu0 0.0
      %844 = vmatpush1.msra.mxu0 0.0
      %845 = vmatprep.subr.mxu0 0.0
      %846 = vmatpush1.msra.mxu0 0.0
      %847 = vmatprep.subr.mxu0 0.0
      %848 = vmatpush1.msra.mxu0 0.0
      %849 = vmatprep.subr.mxu0 0.0
      %850 = vmatpush1.msra.mxu0 0.0
      %851 = vmatprep.subr.mxu0 0.0
      %852 = vmatpush1.msra.mxu0 0.0
      %853 = vmatprep.subr.mxu0 0.0
      %854 = vmatpush1.msra.mxu0 0.0
      %855 = vmatprep.subr.mxu0 0.0
      %856 = vmatpush1.msra.mxu0 0.0
      %857 = vmatprep.subr.mxu0 0.0
      %858 = vmatpush1.msra.mxu0 0.0
      %859 = vmatprep.subr.mxu0 0.0
      %860 = vmatpush1.msra.mxu0 0.0
      %861 = vmatprep.subr.mxu0 0.0
      %862 = vmatpush1.msra.mxu0 0.0
      %863 = vmatprep.subr.mxu0 0.0
      %864 = vmatpush1.msra.mxu0 0.0
      %865 = vmatprep.subr.mxu0 0.0
      %866 = vmatpush1.msra.mxu0 0.0
      %867 = vmatprep.mubr.f32.mxu0 0.0
      %868 = vmatmul.mubr.f32.gmra.mrb[0].mxu0 %v801
      %v869 = vpop.f32.mrb[0].mxu0
      %v870 = vadd.f32 0.0, %v869
      %v871 = vpop.f32.mrb[0].mxu0
      %872 = vdwg.mxu0
      %v873 = vld [vmem:[%s6 + $0x8] sm:$0xff]
      %v875 = vsel %vm543, %v870, 0
      %877 = vmatprep.subr.mxu0 0.0
      %878 = vmatpush1.msra.mxu0 %v873
      %879 = vmatprep.subr.mxu0 0.0
      %880 = vmatpush1.msra.mxu0 0.0
      %881 = vmatprep.subr.mxu0 0.0
      %882 = vmatpush1.msra.mxu0 0.0
      %883 = vmatprep.subr.mxu0 0.0
      %884 = vmatpush1.msra.mxu0 0.0
      %885 = vmatprep.subr.mxu0 0.0
      %886 = vmatpush1.msra.mxu0 0.0
      %887 = vmatprep.subr.mxu0 0.0
      %888 = vmatpush1.msra.mxu0 0.0
      %889 = vmatprep.subr.mxu0 0.0
      %890 = vmatpush1.msra.mxu0 0.0
      %891 = vmatprep.subr.mxu0 0.0
      %892 = vmatpush1.msra.mxu0 0.0
      %893 = vmatprep.subr.mxu0 0.0
      %894 = vmatpush1.msra.mxu0 0.0
      %895 = vmatprep.subr.mxu0 0.0
      %896 = vmatpush1.msra.mxu0 0.0
      %897 = vmatprep.subr.mxu0 0.0
      %898 = vmatpush1.msra.mxu0 0.0
      %899 = vmatprep.subr.mxu0 0.0
      %900 = vmatpush1.msra.mxu0 0.0
      %901 = vmatprep.subr.mxu0 0.0
      %902 = vmatpush1.msra.mxu0 0.0
      %903 = vmatprep.subr.mxu0 0.0
      %904 = vmatpush1.msra.mxu0 0.0
      %905 = vmatprep.subr.mxu0 0.0
      %906 = vmatpush1.msra.mxu0 0.0
      %907 = vmatprep.subr.mxu0 0.0
      %908 = vmatpush1.msra.mxu0 0.0
      %909 = vmatprep.subr.mxu0 0.0
      %910 = vmatpush1.msra.mxu0 0.0
      %911 = vmatprep.subr.mxu0 0.0
      %912 = vmatpush1.msra.mxu0 0.0
      %913 = vmatprep.subr.mxu0 0.0
      %914 = vmatpush1.msra.mxu0 0.0
      %915 = vmatprep.subr.mxu0 0.0
      %916 = vmatpush1.msra.mxu0 0.0
      %917 = vmatprep.subr.mxu0 0.0
      %918 = vmatpush1.msra.mxu0 0.0
      %919 = vmatprep.subr.mxu0 0.0
      %920 = vmatpush1.msra.mxu0 0.0
      %921 = vmatprep.subr.mxu0 0.0
      %922 = vmatpush1.msra.mxu0 0.0
      %923 = vmatprep.subr.mxu0 0.0
      %924 = vmatpush1.msra.mxu0 0.0
      %925 = vmatprep.subr.mxu0 0.0
      %926 = vmatpush1.msra.mxu0 0.0
      %927 = vmatprep.subr.mxu0 0.0
      %928 = vmatpush1.msra.mxu0 0.0
      %929 = vmatprep.subr.mxu0 0.0
      %930 = vmatpush1.msra.mxu0 0.0
      %931 = vmatprep.subr.mxu0 0.0
      %932 = vmatpush1.msra.mxu0 0.0
      %933 = vmatprep.subr.mxu0 0.0
      %934 = vmatpush1.msra.mxu0 0.0
      %935 = vmatprep.subr.mxu0 0.0
      %936 = vmatpush1.msra.mxu0 0.0
      %937 = vmatprep.subr.mxu0 0.0
      %938 = vmatpush1.msra.mxu0 0.0
      %939 = vmatprep.subr.mxu0 0.0
      %940 = vmatpush1.msra.mxu0 0.0
      %941 = vmatprep.mubr.f32.mxu0 0.0
      %942 = vmatmul.mubr.f32.gmra.mrb[0].mxu0 %v875
      %v943 = vpop.f32.mrb[0].mxu0
      %v944 = vadd.f32 0.0, %v943
      %v945 = vpop.f32.mrb[0].mxu0
      %946 = vdwg.mxu0
      %v948 = vsel %vm543, %v704, 0
      %950 = vmatprep.subr.mxu0 0.0
      %951 = vmatpush1.msra.mxu0 %v707
      %952 = vmatprep.subr.mxu0 0.0
      %953 = vmatpush1.msra.mxu0 0.0
      %954 = vmatprep.subr.mxu0 0.0
      %955 = vmatpush1.msra.mxu0 0.0
      %956 = vmatprep.subr.mxu0 0.0
      %957 = vmatpush1.msra.mxu0 0.0
      %958 = vmatprep.subr.mxu0 0.0
      %959 = vmatpush1.msra.mxu0 0.0
      %960 = vmatprep.subr.mxu0 0.0
      %961 = vmatpush1.msra.mxu0 0.0
      %962 = vmatprep.subr.mxu0 0.0
      %963 = vmatpush1.msra.mxu0 0.0
      %964 = vmatprep.subr.mxu0 0.0
      %965 = vmatpush1.msra.mxu0 0.0
      %966 = vmatprep.subr.mxu0 0.0
      %967 = vmatpush1.msra.mxu0 0.0
      %968 = vmatprep.subr.mxu0 0.0
      %969 = vmatpush1.msra.mxu0 0.0
      %970 = vmatprep.subr.mxu0 0.0
      %971 = vmatpush1.msra.mxu0 0.0
      %972 = vmatprep.subr.mxu0 0.0
      %973 = vmatpush1.msra.mxu0 0.0
      %974 = vmatprep.subr.mxu0 0.0
      %975 = vmatpush1.msra.mxu0 0.0
      %976 = vmatprep.subr.mxu0 0.0
      %977 = vmatpush1.msra.mxu0 0.0
      %978 = vmatprep.subr.mxu0 0.0
      %979 = vmatpush1.msra.mxu0 0.0
      %980 = vmatprep.subr.mxu0 0.0
      %981 = vmatpush1.msra.mxu0 0.0
      %982 = vmatprep.subr.mxu0 0.0
      %983 = vmatpush1.msra.mxu0 0.0
      %984 = vmatprep.subr.mxu0 0.0
      %985 = vmatpush1.msra.mxu0 0.0
      %986 = vmatprep.subr.mxu0 0.0
      %987 = vmatpush1.msra.mxu0 0.0
      %988 = vmatprep.subr.mxu0 0.0
      %989 = vmatpush1.msra.mxu0 0.0
      %990 = vmatprep.subr.mxu0 0.0
      %991 = vmatpush1.msra.mxu0 0.0
      %992 = vmatprep.subr.mxu0 0.0
      %993 = vmatpush1.msra.mxu0 0.0
      %994 = vmatprep.subr.mxu0 0.0
      %995 = vmatpush1.msra.mxu0 0.0
      %996 = vmatprep.subr.mxu0 0.0
      %997 = vmatpush1.msra.mxu0 0.0
      %998 = vmatprep.subr.mxu0 0.0
      %999 = vmatpush1.msra.mxu0 0.0
      %1000 = vmatprep.subr.mxu0 0.0
      %1001 = vmatpush1.msra.mxu0 0.0
      %1002 = vmatprep.subr.mxu0 0.0
      %1003 = vmatpush1.msra.mxu0 0.0
      %1004 = vmatprep.subr.mxu0 0.0
      %1005 = vmatpush1.msra.mxu0 0.0
      %1006 = vmatprep.subr.mxu0 0.0
      %1007 = vmatpush1.msra.mxu0 0.0
      %1008 = vmatprep.subr.mxu0 0.0
      %1009 = vmatpush1.msra.mxu0 0.0
      %1010 = vmatprep.subr.mxu0 0.0
      %1011 = vmatpush1.msra.mxu0 0.0
      %1012 = vmatprep.subr.mxu0 0.0
      %1013 = vmatpush1.msra.mxu0 0.0
      %1014 = vmatprep.mubr.f32.mxu0 0.0
      %1015 = vmatmul.mubr.f32.gmra.mrb[0].mxu0 %v948
      %v1016 = vpop.f32.mrb[0].mxu0
      %v1017 = vadd.f32 %v944, %v1016
      %v1018 = vpop.f32.mrb[0].mxu0
      %1019 = vdwg.mxu0
      %1020 = vrot.lane.b32.xlu0 %v456, 112
      %v1021 = vpop.permute.xlu0 %1020
      %1022 = vrot.lane.b32.xlu0 %v540, 112
      %v1023 = vpop.permute.xlu0 %1022
      %v1024 = vsel %vm543, %v1021, 0
      %v1026 = vsel %vm543, %v1023, 0
      %1028 = vmatprep.subr.mxu0 0.0
      %1029 = vmatpush1.xpose.msra.mxu0 %v1026
      %1030 = vmatprep.subr.mxu0 0.0
      %1031 = vmatpush1.xpose.msra.mxu0 0.0
      %1032 = vmatprep.subr.mxu0 0.0
      %1033 = vmatpush1.xpose.msra.mxu0 0.0
      %1034 = vmatprep.subr.mxu0 0.0
      %1035 = vmatpush1.xpose.msra.mxu0 0.0
      %1036 = vmatprep.subr.mxu0 0.0
      %1037 = vmatpush1.xpose.msra.mxu0 0.0
      %1038 = vmatprep.subr.mxu0 0.0
      %1039 = vmatpush1.xpose.msra.mxu0 0.0
      %1040 = vmatprep.subr.mxu0 0.0
      %1041 = vmatpush1.xpose.msra.mxu0 0.0
      %1042 = vmatprep.subr.mxu0 0.0
      %1043 = vmatpush1.xpose.msra.mxu0 0.0
      %1044 = vmatprep.subr.mxu0 0.0
      %1045 = vmatpush1.xpose.msra.mxu0 0.0
      %1046 = vmatprep.subr.mxu0 0.0
      %1047 = vmatpush1.xpose.msra.mxu0 0.0
      %1048 = vmatprep.subr.mxu0 0.0
      %1049 = vmatpush1.xpose.msra.mxu0 0.0
      %1050 = vmatprep.subr.mxu0 0.0
      %1051 = vmatpush1.xpose.msra.mxu0 0.0
      %1052 = vmatprep.subr.mxu0 0.0
      %1053 = vmatpush1.xpose.msra.mxu0 0.0
      %1054 = vmatprep.subr.mxu0 0.0
      %1055 = vmatpush1.xpose.msra.mxu0 0.0
      %1056 = vmatprep.subr.mxu0 0.0
      %1057 = vmatpush1.xpose.msra.mxu0 0.0
      %1058 = vmatprep.subr.mxu0 0.0
      %1059 = vmatpush1.xpose.msra.mxu0 0.0
      %1060 = vmatprep.subr.mxu0 0.0
      %1061 = vmatpush1.xpose.msra.mxu0 0.0
      %1062 = vmatprep.subr.mxu0 0.0
      %1063 = vmatpush1.xpose.msra.mxu0 0.0
      %1064 = vmatprep.subr.mxu0 0.0
      %1065 = vmatpush1.xpose.msra.mxu0 0.0
      %1066 = vmatprep.subr.mxu0 0.0
      %1067 = vmatpush1.xpose.msra.mxu0 0.0
      %1068 = vmatprep.subr.mxu0 0.0
      %1069 = vmatpush1.xpose.msra.mxu0 0.0
      %1070 = vmatprep.subr.mxu0 0.0
      %1071 = vmatpush1.xpose.msra.mxu0 0.0
      %1072 = vmatprep.subr.mxu0 0.0
      %1073 = vmatpush1.xpose.msra.mxu0 0.0
      %1074 = vmatprep.subr.mxu0 0.0
      %1075 = vmatpush1.xpose.msra.mxu0 0.0
      %1076 = vmatprep.subr.mxu0 0.0
      %1077 = vmatpush1.xpose.msra.mxu0 0.0
      %1078 = vmatprep.subr.mxu0 0.0
      %1079 = vmatpush1.xpose.msra.mxu0 0.0
      %1080 = vmatprep.subr.mxu0 0.0
      %1081 = vmatpush1.xpose.msra.mxu0 0.0
      %1082 = vmatprep.subr.mxu0 0.0
      %1083 = vmatpush1.xpose.msra.mxu0 0.0
      %1084 = vmatprep.subr.mxu0 0.0
      %1085 = vmatpush1.xpose.msra.mxu0 0.0
      %1086 = vmatprep.subr.mxu0 0.0
      %1087 = vmatpush1.xpose.msra.mxu0 0.0
      %1088 = vmatprep.subr.mxu0 0.0
      %1089 = vmatpush1.xpose.msra.mxu0 0.0
      %1090 = vmatprep.subr.mxu0 0.0
      %1091 = vmatpush1.xpose.msra.mxu0 0.0
      %1092 = vmatprep.mubr.f32.mxu0 0.0
      %1093 = vmatmul.mubr.f32.gmra.mrb[0].mxu0 %v1024
      %v1094 = vpop.f32.mrb[0].mxu0
      %v1095 = vadd.f32 0.0, %v1094
      %v1096 = vpop.f32.mrb[0].mxu0
      %1097 = vdwg.mxu0
      %v1098 = vsel %vm543, %v1095, -inf
      %1099 = vmax.xlane.f32.xlu0 %v1098
      %v1100 = vpop.xlane.xlu0 %1099
      %v1101 = vsub.f32 %v1095, %v1100
      %v1102 = vmul.f32 %v1101, 1.442695
      %v1103 = vpow.pop %v1102
      %v1104 = vsel %vm543, %v1103, 0.0
      %1105 = vadd.xlane.f32.xlu0 %v1104
      %v1106 = vpop.xlane.xlu0 %1105
      %v1107 = vrcp.pop %v1106
      %v1108 = vmul.f32 %v1103, %v1107
      %1109 = vrot.lane.b32.xlu0 %v540, 80
      %v1110 = vpop.permute.xlu0 %1109
      %v1113 = vsel %vm543, %v1108, 0
      %1115 = vmatprep.subr.mxu0 0.0
      %1116 = vmatpush1.msra.mxu0 %v1110
      %1117 = vmatprep.subr.mxu0 0.0
      %1118 = vmatpush1.msra.mxu0 0.0
      %1119 = vmatprep.subr.mxu0 0.0
      %1120 = vmatpush1.msra.mxu0 0.0
      %1121 = vmatprep.subr.mxu0 0.0
      %1122 = vmatpush1.msra.mxu0 0.0
      %1123 = vmatprep.subr.mxu0 0.0
      %1124 = vmatpush1.msra.mxu0 0.0
      %1125 = vmatprep.subr.mxu0 0.0
      %1126 = vmatpush1.msra.mxu0 0.0
      %1127 = vmatprep.subr.mxu0 0.0
      %1128 = vmatpush1.msra.mxu0 0.0
      %1129 = vmatprep.subr.mxu0 0.0
      %1130 = vmatpush1.msra.mxu0 0.0
      %1131 = vmatprep.subr.mxu0 0.0
      %1132 = vmatpush1.msra.mxu0 0.0
      %1133 = vmatprep.subr.mxu0 0.0
      %1134 = vmatpush1.msra.mxu0 0.0
      %1135 = vmatprep.subr.mxu0 0.0
      %1136 = vmatpush1.msra.mxu0 0.0
      %1137 = vmatprep.subr.mxu0 0.0
      %1138 = vmatpush1.msra.mxu0 0.0
      %1139 = vmatprep.subr.mxu0 0.0
      %1140 = vmatpush1.msra.mxu0 0.0
      %1141 = vmatprep.subr.mxu0 0.0
      %1142 = vmatpush1.msra.mxu0 0.0
      %1143 = vmatprep.subr.mxu0 0.0
      %1144 = vmatpush1.msra.mxu0 0.0
      %1145 = vmatprep.subr.mxu0 0.0
      %1146 = vmatpush1.msra.mxu0 0.0
      %1147 = vmatprep.subr.mxu0 0.0
      %1148 = vmatpush1.msra.mxu0 0.0
      %1149 = vmatprep.subr.mxu0 0.0
      %1150 = vmatpush1.msra.mxu0 0.0
      %1151 = vmatprep.subr.mxu0 0.0
      %1152 = vmatpush1.msra.mxu0 0.0
      %1153 = vmatprep.subr.mxu0 0.0
      %1154 = vmatpush1.msra.mxu0 0.0
      %1155 = vmatprep.subr.mxu0 0.0
      %1156 = vmatpush1.msra.mxu0 0.0
      %1157 = vmatprep.subr.mxu0 0.0
      %1158 = vmatpush1.msra.mxu0 0.0
      %1159 = vmatprep.subr.mxu0 0.0
      %1160 = vmatpush1.msra.mxu0 0.0
      %1161 = vmatprep.subr.mxu0 0.0
      %1162 = vmatpush1.msra.mxu0 0.0
      %1163 = vmatprep.subr.mxu0 0.0
      %1164 = vmatpush1.msra.mxu0 0.0
      %1165 = vmatprep.subr.mxu0 0.0
      %1166 = vmatpush1.msra.mxu0 0.0
      %1167 = vmatprep.subr.mxu0 0.0
      %1168 = vmatpush1.msra.mxu0 0.0
      %1169 = vmatprep.subr.mxu0 0.0
      %1170 = vmatpush1.msra.mxu0 0.0
      %1171 = vmatprep.subr.mxu0 0.0
      %1172 = vmatpush1.msra.mxu0 0.0
      %1173 = vmatprep.subr.mxu0 0.0
      %1174 = vmatpush1.msra.mxu0 0.0
      %1175 = vmatprep.subr.mxu0 0.0
      %1176 = vmatpush1.msra.mxu0 0.0
      %1177 = vmatprep.subr.mxu0 0.0
      %1178 = vmatpush1.msra.mxu0 0.0
      %1179 = vmatprep.mubr.f32.mxu0 0.0
      %1180 = vmatmul.mubr.f32.gmra.mrb[0].mxu0 %v1113
      %v1181 = vpop.f32.mrb[0].mxu0
      %v1182 = vadd.f32 0.0, %v1181
      %v1183 = vpop.f32.mrb[0].mxu0
      %1184 = vdwg.mxu0
      %v1185 = vld [vmem:[%s6 + $0x10] sm:$0xff]
      %v1187 = vsel %vm543, %v1182, 0
      %1189 = vmatprep.subr.mxu0 0.0
      %1190 = vmatpush1.msra.mxu0 %v1185
      %1191 = vmatprep.subr.mxu0 0.0
      %1192 = vmatpush1.msra.mxu0 0.0
      %1193 = vmatprep.subr.mxu0 0.0
      %1194 = vmatpush1.msra.mxu0 0.0
      %1195 = vmatprep.subr.mxu0 0.0
      %1196 = vmatpush1.msra.mxu0 0.0
      %1197 = vmatprep.subr.mxu0 0.0
      %1198 = vmatpush1.msra.mxu0 0.0
      %1199 = vmatprep.subr.mxu0 0.0
      %1200 = vmatpush1.msra.mxu0 0.0
      %1201 = vmatprep.subr.mxu0 0.0
      %1202 = vmatpush1.msra.mxu0 0.0
      %1203 = vmatprep.subr.mxu0 0.0
      %1204 = vmatpush1.msra.mxu0 0.0
      %1205 = vmatprep.subr.mxu0 0.0
      %1206 = vmatpush1.msra.mxu0 0.0
      %1207 = vmatprep.subr.mxu0 0.0
      %1208 = vmatpush1.msra.mxu0 0.0
      %1209 = vmatprep.subr.mxu0 0.0
      %1210 = vmatpush1.msra.mxu0 0.0
      %1211 = vmatprep.subr.mxu0 0.0
      %1212 = vmatpush1.msra.mxu0 0.0
      %1213 = vmatprep.subr.mxu0 0.0
      %1214 = vmatpush1.msra.mxu0 0.0
      %1215 = vmatprep.subr.mxu0 0.0
      %1216 = vmatpush1.msra.mxu0 0.0
      %1217 = vmatprep.subr.mxu0 0.0
      %1218 = vmatpush1.msra.mxu0 0.0
      %1219 = vmatprep.subr.mxu0 0.0
      %1220 = vmatpush1.msra.mxu0 0.0
      %1221 = vmatprep.subr.mxu0 0.0
      %1222 = vmatpush1.msra.mxu0 0.0
      %1223 = vmatprep.subr.mxu0 0.0
      %1224 = vmatpush1.msra.mxu0 0.0
      %1225 = vmatprep.subr.mxu0 0.0
      %1226 = vmatpush1.msra.mxu0 0.0
      %1227 = vmatprep.subr.mxu0 0.0
      %1228 = vmatpush1.msra.mxu0 0.0
      %1229 = vmatprep.subr.mxu0 0.0
      %1230 = vmatpush1.msra.mxu0 0.0
      %1231 = vmatprep.subr.mxu0 0.0
      %1232 = vmatpush1.msra.mxu0 0.0
      %1233 = vmatprep.subr.mxu0 0.0
      %1234 = vmatpush1.msra.mxu0 0.0
      %1235 = vmatprep.subr.mxu0 0.0
      %1236 = vmatpush1.msra.mxu0 0.0
      %1237 = vmatprep.subr.mxu0 0.0
      %1238 = vmatpush1.msra.mxu0 0.0
      %1239 = vmatprep.subr.mxu0 0.0
      %1240 = vmatpush1.msra.mxu0 0.0
      %1241 = vmatprep.subr.mxu0 0.0
      %1242 = vmatpush1.msra.mxu0 0.0
      %1243 = vmatprep.subr.mxu0 0.0
      %1244 = vmatpush1.msra.mxu0 0.0
      %1245 = vmatprep.subr.mxu0 0.0
      %1246 = vmatpush1.msra.mxu0 0.0
      %1247 = vmatprep.subr.mxu0 0.0
      %1248 = vmatpush1.msra.mxu0 0.0
      %1249 = vmatprep.subr.mxu0 0.0
      %1250 = vmatpush1.msra.mxu0 0.0
      %1251 = vmatprep.subr.mxu0 0.0
      %1252 = vmatpush1.msra.mxu0 0.0
      %1253 = vmatprep.mubr.f32.mxu0 0.0
      %1254 = vmatmul.mubr.f32.gmra.mrb[0].mxu0 %v1187
      %v1255 = vpop.f32.mrb[0].mxu0
      %v1256 = vadd.f32 0.0, %v1255
      %v1257 = vpop.f32.mrb[0].mxu0
      %1258 = vdwg.mxu0
      %v1259 = vadd.f32 %v1017, %v1256
      %1260 = vrot.lane.b32.xlu0 %v456, 104
      %v1261 = vpop.permute.xlu0 %1260
      %1262 = vrot.lane.b32.xlu0 %v540, 104
      %v1263 = vpop.permute.xlu0 %1262
      %v1264 = vsel %vm543, %v1261, 0
      %v1266 = vsel %vm543, %v1263, 0
      %1268 = vmatprep.subr.mxu0 0.0
      %1269 = vmatpush1.xpose.msra.mxu0 %v1266
      %1270 = vmatprep.subr.mxu0 0.0
      %1271 = vmatpush1.xpose.msra.mxu0 0.0
      %1272 = vmatprep.subr.mxu0 0.0
      %1273 = vmatpush1.xpose.msra.mxu0 0.0
      %1274 = vmatprep.subr.mxu0 0.0
      %1275 = vmatpush1.xpose.msra.mxu0 0.0
      %1276 = vmatprep.subr.mxu0 0.0
      %1277 = vmatpush1.xpose.msra.mxu0 0.0
      %1278 = vmatprep.subr.mxu0 0.0
      %1279 = vmatpush1.xpose.msra.mxu0 0.0
      %1280 = vmatprep.subr.mxu0 0.0
      %1281 = vmatpush1.xpose.msra.mxu0 0.0
      %1282 = vmatprep.subr.mxu0 0.0
      %1283 = vmatpush1.xpose.msra.mxu0 0.0
      %1284 = vmatprep.subr.mxu0 0.0
      %1285 = vmatpush1.xpose.msra.mxu0 0.0
      %1286 = vmatprep.subr.mxu0 0.0
      %1287 = vmatpush1.xpose.msra.mxu0 0.0
      %1288 = vmatprep.subr.mxu0 0.0
      %1289 = vmatpush1.xpose.msra.mxu0 0.0
      %1290 = vmatprep.subr.mxu0 0.0
      %1291 = vmatpush1.xpose.msra.mxu0 0.0
      %1292 = vmatprep.subr.mxu0 0.0
      %1293 = vmatpush1.xpose.msra.mxu0 0.0
      %1294 = vmatprep.subr.mxu0 0.0
      %1295 = vmatpush1.xpose.msra.mxu0 0.0
      %1296 = vmatprep.subr.mxu0 0.0
      %1297 = vmatpush1.xpose.msra.mxu0 0.0
      %1298 = vmatprep.subr.mxu0 0.0
      %1299 = vmatpush1.xpose.msra.mxu0 0.0
      %1300 = vmatprep.subr.mxu0 0.0
      %1301 = vmatpush1.xpose.msra.mxu0 0.0
      %1302 = vmatprep.subr.mxu0 0.0
      %1303 = vmatpush1.xpose.msra.mxu0 0.0
      %1304 = vmatprep.subr.mxu0 0.0
      %1305 = vmatpush1.xpose.msra.mxu0 0.0
      %1306 = vmatprep.subr.mxu0 0.0
      %1307 = vmatpush1.xpose.msra.mxu0 0.0
      %1308 = vmatprep.subr.mxu0 0.0
      %1309 = vmatpush1.xpose.msra.mxu0 0.0
      %1310 = vmatprep.subr.mxu0 0.0
      %1311 = vmatpush1.xpose.msra.mxu0 0.0
      %1312 = vmatprep.subr.mxu0 0.0
      %1313 = vmatpush1.xpose.msra.mxu0 0.0
      %1314 = vmatprep.subr.mxu0 0.0
      %1315 = vmatpush1.xpose.msra.mxu0 0.0
      %1316 = vmatprep.subr.mxu0 0.0
      %1317 = vmatpush1.xpose.msra.mxu0 0.0
      %1318 = vmatprep.subr.mxu0 0.0
      %1319 = vmatpush1.xpose.msra.mxu0 0.0
      %1320 = vmatprep.subr.mxu0 0.0
      %1321 = vmatpush1.xpose.msra.mxu0 0.0
      %1322 = vmatprep.subr.mxu0 0.0
      %1323 = vmatpush1.xpose.msra.mxu0 0.0
      %1324 = vmatprep.subr.mxu0 0.0
      %1325 = vmatpush1.xpose.msra.mxu0 0.0
      %1326 = vmatprep.subr.mxu0 0.0
      %1327 = vmatpush1.xpose.msra.mxu0 0.0
      %1328 = vmatprep.subr.mxu0 0.0
      %1329 = vmatpush1.xpose.msra.mxu0 0.0
      %1330 = vmatprep.subr.mxu0 0.0
      %1331 = vmatpush1.xpose.msra.mxu0 0.0
      %1332 = vmatprep.mubr.f32.mxu0 0.0
      %1333 = vmatmul.mubr.f32.gmra.mrb[0].mxu0 %v1264
      %v1334 = vpop.f32.mrb[0].mxu0
      %v1335 = vadd.f32 0.0, %v1334
      %v1336 = vpop.f32.mrb[0].mxu0
      %1337 = vdwg.mxu0
      %v1338 = vsel %vm543, %v1335, -inf
      %1339 = vmax.xlane.f32.xlu0 %v1338
      %v1340 = vpop.xlane.xlu0 %1339
      %v1341 = vsub.f32 %v1335, %v1340
      %v1342 = vmul.f32 %v1341, 1.442695
      %v1343 = vpow.pop %v1342
      %v1344 = vsel %vm543, %v1343, 0.0
      %1345 = vadd.xlane.f32.xlu0 %v1344
      %v1346 = vpop.xlane.xlu0 %1345
      %v1347 = vrcp.pop %v1346
      %v1348 = vmul.f32 %v1343, %v1347
      %1349 = vrot.lane.b32.xlu0 %v540, 72
      %v1350 = vpop.permute.xlu0 %1349
      %v1353 = vsel %vm543, %v1348, 0
      %1355 = vmatprep.subr.mxu0 0.0
      %1356 = vmatpush1.msra.mxu0 %v1350
      %1357 = vmatprep.subr.mxu0 0.0
      %1358 = vmatpush1.msra.mxu0 0.0
      %1359 = vmatprep.subr.mxu0 0.0
      %1360 = vmatpush1.msra.mxu0 0.0
      %1361 = vmatprep.subr.mxu0 0.0
      %1362 = vmatpush1.msra.mxu0 0.0
      %1363 = vmatprep.subr.mxu0 0.0
      %1364 = vmatpush1.msra.mxu0 0.0
      %1365 = vmatprep.subr.mxu0 0.0
      %1366 = vmatpush1.msra.mxu0 0.0
      %1367 = vmatprep.subr.mxu0 0.0
      %1368 = vmatpush1.msra.mxu0 0.0
      %1369 = vmatprep.subr.mxu0 0.0
      %1370 = vmatpush1.msra.mxu0 0.0
      %1371 = vmatprep.subr.mxu0 0.0
      %1372 = vmatpush1.msra.mxu0 0.0
      %1373 = vmatprep.subr.mxu0 0.0
      %1374 = vmatpush1.msra.mxu0 0.0
      %1375 = vmatprep.subr.mxu0 0.0
      %1376 = vmatpush1.msra.mxu0 0.0
      %1377 = vmatprep.subr.mxu0 0.0
      %1378 = vmatpush1.msra.mxu0 0.0
      %1379 = vmatprep.subr.mxu0 0.0
      %1380 = vmatpush1.msra.mxu0 0.0
      %1381 = vmatprep.subr.mxu0 0.0
      %1382 = vmatpush1.msra.mxu0 0.0
      %1383 = vmatprep.subr.mxu0 0.0
      %1384 = vmatpush1.msra.mxu0 0.0
      %1385 = vmatprep.subr.mxu0 0.0
      %1386 = vmatpush1.msra.mxu0 0.0
      %1387 = vmatprep.subr.mxu0 0.0
      %1388 = vmatpush1.msra.mxu0 0.0
      %1389 = vmatprep.subr.mxu0 0.0
      %1390 = vmatpush1.msra.mxu0 0.0
      %1391 = vmatprep.subr.mxu0 0.0
      %1392 = vmatpush1.msra.mxu0 0.0
      %1393 = vmatprep.subr.mxu0 0.0
      %1394 = vmatpush1.msra.mxu0 0.0
      %1395 = vmatprep.subr.mxu0 0.0
      %1396 = vmatpush1.msra.mxu0 0.0
      %1397 = vmatprep.subr.mxu0 0.0
      %1398 = vmatpush1.msra.mxu0 0.0
      %1399 = vmatprep.subr.mxu0 0.0
      %1400 = vmatpush1.msra.mxu0 0.0
      %1401 = vmatprep.subr.mxu0 0.0
      %1402 = vmatpush1.msra.mxu0 0.0
      %1403 = vmatprep.subr.mxu0 0.0
      %1404 = vmatpush1.msra.mxu0 0.0
      %1405 = vmatprep.subr.mxu0 0.0
      %1406 = vmatpush1.msra.mxu0 0.0
      %1407 = vmatprep.subr.mxu0 0.0
      %1408 = vmatpush1.msra.mxu0 0.0
      %1409 = vmatprep.subr.mxu0 0.0
      %1410 = vmatpush1.msra.mxu0 0.0
      %1411 = vmatprep.subr.mxu0 0.0
      %1412 = vmatpush1.msra.mxu0 0.0
      %1413 = vmatprep.subr.mxu0 0.0
      %1414 = vmatpush1.msra.mxu0 0.0
      %1415 = vmatprep.subr.mxu0 0.0
      %1416 = vmatpush1.msra.mxu0 0.0
      %1417 = vmatprep.subr.mxu0 0.0
      %1418 = vmatpush1.msra.mxu0 0.0
      %1419 = vmatprep.mubr.f32.mxu0 0.0
      %1420 = vmatmul.mubr.f32.gmra.mrb[0].mxu0 %v1353
      %v1421 = vpop.f32.mrb[0].mxu0
      %v1422 = vadd.f32 0.0, %v1421
      %v1423 = vpop.f32.mrb[0].mxu0
      %1424 = vdwg.mxu0
      %v1425 = vld [vmem:[%s6 + $0x18] sm:$0xff]
      %v1427 = vsel %vm543, %v1422, 0
      %1429 = vmatprep.subr.mxu0 0.0
      %1430 = vmatpush1.msra.mxu0 %v1425
      %1431 = vmatprep.subr.mxu0 0.0
      %1432 = vmatpush1.msra.mxu0 0.0
      %1433 = vmatprep.subr.mxu0 0.0
      %1434 = vmatpush1.msra.mxu0 0.0
      %1435 = vmatprep.subr.mxu0 0.0
      %1436 = vmatpush1.msra.mxu0 0.0
      %1437 = vmatprep.subr.mxu0 0.0
      %1438 = vmatpush1.msra.mxu0 0.0
      %1439 = vmatprep.subr.mxu0 0.0
      %1440 = vmatpush1.msra.mxu0 0.0
      %1441 = vmatprep.subr.mxu0 0.0
      %1442 = vmatpush1.msra.mxu0 0.0
      %1443 = vmatprep.subr.mxu0 0.0
      %1444 = vmatpush1.msra.mxu0 0.0
      %1445 = vmatprep.subr.mxu0 0.0
      %1446 = vmatpush1.msra.mxu0 0.0
      %1447 = vmatprep.subr.mxu0 0.0
      %1448 = vmatpush1.msra.mxu0 0.0
      %1449 = vmatprep.subr.mxu0 0.0
      %1450 = vmatpush1.msra.mxu0 0.0
      %1451 = vmatprep.subr.mxu0 0.0
      %1452 = vmatpush1.msra.mxu0 0.0
      %1453 = vmatprep.subr.mxu0 0.0
      %1454 = vmatpush1.msra.mxu0 0.0
      %1455 = vmatprep.subr.mxu0 0.0
      %1456 = vmatpush1.msra.mxu0 0.0
      %1457 = vmatprep.subr.mxu0 0.0
      %1458 = vmatpush1.msra.mxu0 0.0
      %1459 = vmatprep.subr.mxu0 0.0
      %1460 = vmatpush1.msra.mxu0 0.0
      %1461 = vmatprep.subr.mxu0 0.0
      %1462 = vmatpush1.msra.mxu0 0.0
      %1463 = vmatprep.subr.mxu0 0.0
      %1464 = vmatpush1.msra.mxu0 0.0
      %1465 = vmatprep.subr.mxu0 0.0
      %1466 = vmatpush1.msra.mxu0 0.0
      %1467 = vmatprep.subr.mxu0 0.0
      %1468 = vmatpush1.msra.mxu0 0.0
      %1469 = vmatprep.subr.mxu0 0.0
      %1470 = vmatpush1.msra.mxu0 0.0
      %1471 = vmatprep.subr.mxu0 0.0
      %1472 = vmatpush1.msra.mxu0 0.0
      %1473 = vmatprep.subr.mxu0 0.0
      %1474 = vmatpush1.msra.mxu0 0.0
      %1475 = vmatprep.subr.mxu0 0.0
      %1476 = vmatpush1.msra.mxu0 0.0
      %1477 = vmatprep.subr.mxu0 0.0
      %1478 = vmatpush1.msra.mxu0 0.0
      %1479 = vmatprep.subr.mxu0 0.0
      %1480 = vmatpush1.msra.mxu0 0.0
      %1481 = vmatprep.subr.mxu0 0.0
      %1482 = vmatpush1.msra.mxu0 0.0
      %1483 = vmatprep.subr.mxu0 0.0
      %1484 = vmatpush1.msra.mxu0 0.0
      %1485 = vmatprep.subr.mxu0 0.0
      %1486 = vmatpush1.msra.mxu0 0.0
      %1487 = vmatprep.subr.mxu0 0.0
      %1488 = vmatpush1.msra.mxu0 0.0
      %1489 = vmatprep.subr.mxu0 0.0
      %1490 = vmatpush1.msra.mxu0 0.0
      %1491 = vmatprep.subr.mxu0 0.0
      %1492 = vmatpush1.msra.mxu0 0.0
      %1493 = vmatprep.mubr.f32.mxu0 0.0
      %1494 = vmatmul.mubr.f32.gmra.mrb[0].mxu0 %v1427
      %v1495 = vpop.f32.mrb[0].mxu0
      %v1496 = vadd.f32 0.0, %v1495
      %v1497 = vpop.f32.mrb[0].mxu0
      %1498 = vdwg.mxu0
      %v1499 = vadd.f32 %v1259, %v1496
      %v1500 = vld [vmem:[%s7] sm:$0x1]
      %v1502 = vlaneseq
      %v1503 = vshrl.u32 %v1502, 7
      %v1504 = vsub.s32 0, %v1503
      %v1505 = vrot.slane %v1500, %v1504
      %v1507 = vadd.f32 %v1499, %v1505
      %v1508 = vadd.f32 %v1507, %v372
      %v1509 = vsel %vm385, %v1508, 0.0
      %1510 = vadd.xlane.f32.xlu0 %v1509
      %v1511 = vpop.xlane.xlu0 %1510
      %v1512 = vrcp.pop 32.0
      %v1513 = vmul.f32 %v1511, %v1512
      %v1514 = vsub.f32 %v1508, %v1513
      %v1515 = vmul.f32 %v1514, %v1514
      %v1516 = vsel %vm385, %v1515, 0.0
      %1517 = vadd.xlane.f32.xlu0 %v1516
      %v1518 = vpop.xlane.xlu0 %1517
      %v1519 = vmul.f32 %v1518, %v1512
      %v1520 = vadd.f32 %v1519, 1e-05
      %v1521 = vrsqrt.pop %v1520
      %v1522 = vmul.f32 %v1514, %v1521
      %v1523 = vld [vmem:[%s8] sm:$0x1]
      %v1525 = vlaneseq
      %v1526 = vshrl.u32 %v1525, 7
      %v1527 = vsub.s32 0, %v1526
      %v1528 = vrot.slane %v1523, %v1527
      %v1530 = vmul.f32 %v1522, %v1528
      %v1531 = vld [vmem:[%s9] sm:$0x1]
      %v1533 = vlaneseq
      %v1534 = vshrl.u32 %v1533, 7
      %v1535 = vsub.s32 0, %v1534
      %v1536 = vrot.slane %v1531, %v1535
      %v1538 = vadd.f32 %v1530, %v1536
      %1539 = vst.msk [vmem:[%s371] sm:$0xff] %vm385, %v1538
      %p1540 = scmp.lt.s32.totalorder %s21, 1
      %s1541 = scalar_select %p1540, %s21, 1
      %s1542 = smul.addr %s1541, 8
      %s1543 = scalar_lea.vmem %s10, %s1542
      // Predicated region
      $region61: #{transformer_forward.11} parent=59 // pred_check
        %p1544 = pneg %p259
      $region62: #{transformer_forward.11} parent=59 // pred_check_branch
        %1546 = sbr.rel (%p1544) target = $region64
      $region63: #{transformer_forward.11} parent=59 // pred_region
        _
      $region64: #{transformer_forward.11} parent=59 // pred_fallthru
        _
    $region60: #{transformer_forward.11} parent=5 // pred_fallthru
      _
    %p1547 = scmp.le.s32.totalorder 2, %s16
    // Predicated region
    $region65: #{transformer_forward.11} parent=5 // pred_check
      %p1548 = pneg %p1547
    $region66: #{transformer_forward.11} parent=5 // pred_check_branch
      %1550 = sbr.rel (%p1548) target = $region68
    $region67: #{transformer_forward.11} parent=5 // pred_region
      %s1551 = ssub.s32 %s16, 2
      // Predicated region
      $region69: #{transformer_forward.11} parent=67 // pred_check
        %p1552 = pneg %p265
      $region70: #{transformer_forward.11} parent=67 // pred_check_branch
        %1554 = sbr.rel (%p1552) target = $region72
      $region71: #{transformer_forward.11} parent=67 // pred_region
        %p1555 = scmp.lt.s32.totalorder %s22, 1
        %s1556 = scalar_select %p1555, %s22, 1
        %s1557 = smul.addr %s1556, 8
        %s1558 = scalar_lea.vmem %s10, %s1557
      $region72: #{transformer_forward.11} parent=67 // pred_fallthru
        _
    $region68: #{transformer_forward.11} parent=5 // pred_fallthru
      _
  $region6: #{transformer_forward.11} parent=0 // loop_footer
    %s20 = sadd.s32 1, %s16
  $region7: #{transformer_forward.11} parent=0 // loop_footer_branch
    %15 = sbr.rel target = $region3
  $region8: #{transformer_forward.11} parent=0 // loop_exit
    _

</llo_original>
